<compile_context>
chip_gen: v6e
topology: v6e:2x2x1
jax: 0.10.0
libtpu: 0.0.40
codegen_flags: <defaults>
</compile_context>

<pallas_src>
import functools

import jax
import jax.numpy as jnp
from jax import lax
from jax.experimental import pallas as pl
from jax.experimental.pallas import tpu as pltpu


_ONEHOT_MAX_VOCAB = 256   # beyond this the one-hot matmul stops being "free"


def _onehot_gather_kernel(ids_ref, table_ref, out_ref, *, exact_precision):
    """Small-vocab gather: onehot(ids) @ table on the MXU (exact: 1.0 * x).

    ids_ref:   (TILE, 1) int32 block of token ids (VMEM)
    table_ref: (V, Dp)   full embedding table (VMEM-resident across steps)
    out_ref:   (TILE, Dp) output block
    """
    ids = ids_ref[...]                                       # (TILE, 1) int32
    tile = ids.shape[0]
    vocab = table_ref.shape[0]
    col = lax.broadcasted_iota(jnp.int32, (tile, vocab), 1)  # (TILE, V)
    onehot = (col == ids).astype(table_ref.dtype)            # (TILE, V)
    dot_kwargs = dict(preferred_element_type=jnp.float32)
    if exact_precision:
        # Never demote the f32 table rows to a single bf16 MXU pass.
        dot_kwargs["precision"] = lax.Precision.HIGHEST
    out_ref[...] = jnp.dot(onehot, table_ref[...],
                           **dot_kwargs).astype(out_ref.dtype)


def _take_gather_kernel(ids_ref, table_ref, out_ref):
    """Larger-vocab gather: vectorized row take on the VMEM-resident table."""
    ids = ids_ref[...][:, 0]                                 # (TILE,) int32
    out_ref[...] = jnp.take(table_ref[...], ids, axis=0).astype(out_ref.dtype)


def _round_up(x: int, m: int) -> int:
    return ((x + m - 1) // m) * m


def _vmem_budget_bytes() -> int:
    """~90% of this generation's per-core VMEM (64 MiB v7x, 128 MiB v5e/v6e)."""
    try:
        cap = int(pltpu.get_tpu_info().vmem_capacity_bytes)
    except Exception:
        cap = 64 << 20    # conservative fallback: v7x per-TensorCore VMEM
    return int(cap * 0.9)


def flat_embedding_lookup(input_ids: jax.Array, table: jax.Array,
                          *, token_tile: int | None = None) -> jax.Array:
    """Equivalent of FlatEmbedding.forward: table[input_ids]."""
    orig_shape = tuple(input_ids.shape)
    vocab, dim = table.shape
    dtype = table.dtype
    itemsize = jnp.dtype(dtype).itemsize
    sublane = max(8, 32 // max(itemsize, 1))      # 8 f32, 16 bf16, 32 int8

    n_tokens = 1
    for s in orig_shape:
        n_tokens *= s
    if n_tokens == 0:                             # empty input: no kernel launch
        return jnp.zeros((*orig_shape, dim), dtype)

    # Lane-dense output stores: pad the feature dim to a multiple of 128.
    dim_p = _round_up(dim, 128)
    table_p = table if dim_p == dim else jnp.pad(
        table, ((0, 0), (0, dim_p - dim)))

    # Flatten and clamp ids so no id can ever index outside the table.
    ids_flat = jnp.clip(jnp.asarray(input_ids, jnp.int32).reshape(-1),
                        0, vocab - 1)

    budget = _vmem_budget_bytes()
    table_bytes = vocab * dim_p * itemsize
    assert table_bytes + (8 << 20) <= budget, (
        "embedding table too large to keep VMEM-resident on this TPU "
        "generation; needs the HBM-resident row-gather variant")

    use_onehot = vocab <= _ONEHOT_MAX_VOCAB

    # Token tile: default 512 (amortizes ~0.35 us/step, ~85% of HBM roofline),
    # sublane-rounded, clamped to the token count, shrunk to fit the budget.
    if token_tile is None:
        token_tile = 512
    tile = _round_up(min(token_tile, n_tokens), sublane)

    def _needed(t: int, table_bufs: int) -> int:
        onehot_b = t * vocab * itemsize if use_onehot else 0
        return (table_bufs * table_bytes + 2 * t * dim_p * itemsize
                + 2 * t * 4 + onehot_b + (4 << 20))

    while tile > sublane and _needed(tile, 1) > budget:
        tile = _round_up(tile // 2, sublane)

    n_pad = _round_up(n_tokens, tile)
    if n_pad != n_tokens:
        ids_flat = jnp.pad(ids_flat, (0, n_pad - n_tokens))   # pad id 0 (valid)
    ids_2d = ids_flat.reshape(n_pad, 1)
    grid = (n_pad // tile,)

    def _call(single_buffer_table: bool, pin_precision: bool):
        if use_onehot:
            kernel = functools.partial(_onehot_gather_kernel,
                                       exact_precision=pin_precision)
        else:
            kernel = _take_gather_kernel
        table_kwargs = (
            {"pipeline_mode": pl.Buffered(1)} if single_buffer_table else {})
        table_bufs = 1 if single_buffer_table else 2
        vmem_limit = int(min(max(_needed(tile, table_bufs), 16 << 20), budget))
        return pl.pallas_call(
            kernel,
            out_shape=jax.ShapeDtypeStruct((n_pad, dim_p), dtype),
            grid=grid,
            in_specs=[
                # Per-step (TILE, 1) id block.
                pl.BlockSpec((tile, 1), lambda i: (i, 0)),
                # Whole table, constant block index -> fetched once, resident.
                pl.BlockSpec((vocab, dim_p), lambda i: (0, 0), **table_kwargs),
            ],
            out_specs=pl.BlockSpec((tile, dim_p), lambda i: (i, 0)),
            compiler_params=pltpu.CompilerParams(
                dimension_semantics=("parallel",),   # independent output tiles
                vmem_limit_bytes=vmem_limit,
            ),
        )(ids_2d, table_p)

    # Preferred config first; degrade gracefully if this Pallas build rejects
    # Buffered(1) or a pinned matmul precision.  Genuine errors re-raise.
    out_flat = None
    last_err = None
    for single_buf, pin_prec in ((True, True), (True, False),
                                 (False, True), (False, False)):
        try:
            out_flat = _call(single_buf, pin_prec)
            break
        except Exception as err:
            last_err = err
    if out_flat is None:
        raise last_err

    out_flat = out_flat[:n_tokens, :dim]
    return out_flat.reshape(*orig_shape, dim)


if __name__ == "__main__":
    key = jax.random.PRNGKey(0)
    k_tab1, k_ids1, k_tab2, k_ids2 = jax.random.split(key, 4)

    # Case 1: the module's typical tiny-vocab configuration.
    embedding_size, embedding_dim = 32, 128
    batch, seq = 2, 8
    table = jax.random.normal(k_tab1, (embedding_size, embedding_dim),
                              dtype=jnp.float32)      # nn.Embedding ~ N(0, 1)
    input_ids = jax.random.randint(k_ids1, (batch, seq), 0, embedding_size,
                                   dtype=jnp.int32)
    out = jax.block_until_ready(flat_embedding_lookup(input_ids, table))
    ref = table[input_ids]
    assert out.shape == (batch, seq, embedding_dim)
    assert out.dtype == table.dtype
    assert jnp.allclose(out, ref, rtol=1e-5, atol=1e-6), \
        "mismatch vs reference gather (case 1)"

    # Case 2: non-lane-aligned feature dim + non-sublane-aligned token count
    # (exercises the D-padding and token-padding paths).
    table2 = jax.random.normal(k_tab2, (40, 96), dtype=jnp.float32)
    ids2 = jax.random.randint(k_ids2, (3, 7), 0, 40, dtype=jnp.int32)
    out2 = jax.block_until_ready(flat_embedding_lookup(ids2, table2))
    assert out2.shape == (3, 7, 96)
    assert jnp.allclose(out2, table2[ids2], rtol=1e-5, atol=1e-6), \
        "mismatch vs reference gather (case 2)"

    print("KERNEL_OK")
</pallas_src>

<mosaic_0001>
module attributes {stable_mosaic.version = 11 : i64} {
  func.func @_onehot_gather_kernel(%arg0: i32, %arg1: memref<16x1xi32, #tpu.memory_space<vmem>>, %arg2: memref<32x128xf32, #tpu.memory_space<vmem>>, %arg3: memref<16x128xf32, #tpu.memory_space<vmem>>) attributes {dimension_semantics = [#tpu.dimension_semantics<parallel>], iteration_bounds = array<i64: 1>, scalar_prefetch = 0 : i64, scratch_operands = 0 : i64, tpu.core_type = #tpu.core_type<tc>, window_params = [{transform_indices = @transform_0, window_bounds = array<i64: 16, 1>}, {pipeline_mode = #tpu.pipeline_mode<synchronous>, transform_indices = @transform_1, window_bounds = array<i64: 32, 128>}, {transform_indices = @transform_2, window_bounds = array<i64: 16, 128>}]} {
    %c0 = arith.constant 0 : index
    %c0_0 = arith.constant 0 : index
    %0 = vector.load %arg1[%c0, %c0_0] : memref<16x1xi32, #tpu.memory_space<vmem>>, vector<16x1xi32>
    %1 = tpu.iota {dimensions = array<i32: 1>} : vector<16x32xi32>
    %2 = vector.broadcast %0 : vector<16x1xi32> to vector<16x32xi32>
    %3 = arith.cmpi eq, %1, %2 : vector<16x32xi32>
    %4 = arith.extui %3 : vector<16x32xi1> to vector<16x32xi32>
    %5 = arith.sitofp %4 : vector<16x32xi32> to vector<16x32xf32>
    %c0_1 = arith.constant 0 : index
    %c0_2 = arith.constant 0 : index
    %6 = vector.load %arg2[%c0_1, %c0_2] : memref<32x128xf32, #tpu.memory_space<vmem>>, vector<32x128xf32>
    %cst = arith.constant dense<0.000000e+00> : vector<16x128xf32>
    %7 = tpu.matmul %5, %6, %cst {dimension_numbers = #tpu.dot_dimension_numbers<[1], [0], [0], [1], [0, 0, 1, 1], [], []>, precision = #tpu.contract_precision<fp32>} : vector<16x32xf32>, vector<32x128xf32>, vector<16x128xf32> -> vector<16x128xf32>
    %c0_3 = arith.constant 0 : index
    %c0_4 = arith.constant 0 : index
    %8 = vector.load %arg3[%c0_3, %c0_4] : memref<16x128xf32, #tpu.memory_space<vmem>>, vector<16x128xf32>
    tpu.vector_store %arg3[%c0_3, %c0_4], %7 {strides = array<i32>} : memref<16x128xf32, #tpu.memory_space<vmem>>, vector<16x128xf32>,
    return
  }
  func.func @transform_0(%arg0: i32) -> (i32, i32) {
    %c0_i32 = arith.constant 0 : i32
    %c0_i32_0 = arith.constant 0 : i32
    return %arg0, %c0_i32 : i32, i32
  }
  func.func @transform_1(%arg0: i32) -> (i32, i32) {
    %c0_i32 = arith.constant 0 : i32
    %c0_i32_0 = arith.constant 0 : i32
    %c0_i32_1 = arith.constant 0 : i32
    return %c0_i32, %c0_i32_0 : i32, i32
  }
  func.func @transform_2(%arg0: i32) -> (i32, i32) {
    %c0_i32 = arith.constant 0 : i32
    %c0_i32_0 = arith.constant 0 : i32
    return %arg0, %c0_i32 : i32, i32
  }
}

module attributes {stable_mosaic.version = 11 : i64} {
  func.func @_onehot_gather_kernel(%arg0: i32, %arg1: memref<16x1xi32, #tpu.memory_space<vmem>>, %arg2: memref<32x128xf32, #tpu.memory_space<vmem>>, %arg3: memref<16x128xf32, #tpu.memory_space<vmem>>) attributes {dimension_semantics = [#tpu.dimension_semantics<parallel>], iteration_bounds = array<i64: 1>, scalar_prefetch = 0 : i64, scratch_operands = 0 : i64, tpu.core_type = #tpu.core_type<tc>, window_params = [{transform_indices = @transform_0, window_bounds = array<i64: 16, 1>}, {pipeline_mode = #tpu.pipeline_mode<synchronous>, transform_indices = @transform_1, window_bounds = array<i64: 32, 128>}, {transform_indices = @transform_2, window_bounds = array<i64: 16, 128>}]} {
    %c0 = arith.constant 0 : index
    %c0_0 = arith.constant 0 : index
    %0 = vector.load %arg1[%c0, %c0_0] : memref<16x1xi32, #tpu.memory_space<vmem>>, vector<16x1xi32>
    %1 = tpu.iota {dimensions = array<i32: 1>} : vector<16x32xi32>
    %2 = vector.broadcast %0 : vector<16x1xi32> to vector<16x32xi32>
    %3 = arith.cmpi eq, %1, %2 : vector<16x32xi32>
    %4 = arith.extui %3 : vector<16x32xi1> to vector<16x32xi32>
    %5 = arith.sitofp %4 : vector<16x32xi32> to vector<16x32xf32>
    %c0_1 = arith.constant 0 : index
    %c0_2 = arith.constant 0 : index
    %6 = vector.load %arg2[%c0_1, %c0_2] : memref<32x128xf32, #tpu.memory_space<vmem>>, vector<32x128xf32>
    %cst = arith.constant dense<0.000000e+00> : vector<16x128xf32>
    %7 = tpu.matmul %5, %6, %cst {dimension_numbers = #tpu.dot_dimension_numbers<[1], [0], [0], [1], [0, 0, 1, 1], [], []>} : vector<16x32xf32>, vector<32x128xf32>, vector<16x128xf32> -> vector<16x128xf32>
    %c0_3 = arith.constant 0 : index
    %c0_4 = arith.constant 0 : index
    %8 = vector.load %arg3[%c0_3, %c0_4] : memref<16x128xf32, #tpu.memory_space<vmem>>, vector<16x128xf32>
    tpu.vector_store %arg3[%c0_3, %c0_4], %7 {strides = array<i32>} : memref<16x128xf32, #tpu.memory_space<vmem>>, vector<16x128xf32>,
    return
  }
  func.func @transform_0(%arg0: i32) -> (i32, i32) {
    %c0_i32 = arith.constant 0 : i32
    %c0_i32_0 = arith.constant 0 : i32
    return %arg0, %c0_i32 : i32, i32
  }
  func.func @transform_1(%arg0: i32) -> (i32, i32) {
    %c0_i32 = arith.constant 0 : i32
    %c0_i32_0 = arith.constant 0 : i32
    %c0_i32_1 = arith.constant 0 : i32
    return %c0_i32, %c0_i32_0 : i32, i32
  }
  func.func @transform_2(%arg0: i32) -> (i32, i32) {
    %c0_i32 = arith.constant 0 : i32
    %c0_i32_0 = arith.constant 0 : i32
    return %arg0, %c0_i32 : i32, i32
  }
}

module attributes {stable_mosaic.version = 11 : i64} {
  func.func @_onehot_gather_kernel(%arg0: i32, %arg1: memref<16x1xi32, #tpu.memory_space<vmem>>, %arg2: memref<32x128xf32, #tpu.memory_space<vmem>>, %arg3: memref<16x128xf32, #tpu.memory_space<vmem>>) attributes {dimension_semantics = [#tpu.dimension_semantics<parallel>], iteration_bounds = array<i64: 1>, scalar_prefetch = 0 : i64, scratch_operands = 0 : i64, tpu.core_type = #tpu.core_type<tc>, window_params = [{transform_indices = @transform_0, window_bounds = array<i64: 16, 1>}, {pipeline_mode = #tpu.pipeline_mode<synchronous>, transform_indices = @transform_1, window_bounds = array<i64: 32, 128>}, {transform_indices = @transform_2, window_bounds = array<i64: 16, 128>}]} {
    %c0 = arith.constant 0 : index
    %c0_0 = arith.constant 0 : index
    %0 = vector.load %arg1[%c0, %c0_0] : memref<16x1xi32, #tpu.memory_space<vmem>>, vector<16x1xi32>
    %1 = tpu.iota {dimensions = array<i32: 1>} : vector<16x32xi32>
    %2 = vector.broadcast %0 : vector<16x1xi32> to vector<16x32xi32>
    %3 = arith.cmpi eq, %1, %2 : vector<16x32xi32>
    %4 = arith.extui %3 : vector<16x32xi1> to vector<16x32xi32>
    %5 = arith.sitofp %4 : vector<16x32xi32> to vector<16x32xf32>
    %c0_1 = arith.constant 0 : index
    %c0_2 = arith.constant 0 : index
    %6 = vector.load %arg2[%c0_1, %c0_2] : memref<32x128xf32, #tpu.memory_space<vmem>>, vector<32x128xf32>
    %cst = arith.constant dense<0.000000e+00> : vector<16x128xf32>
    %7 = tpu.matmul %5, %6, %cst {dimension_numbers = #tpu.dot_dimension_numbers<[1], [0], [0], [1], [0, 0, 1, 1], [], []>, precision = #tpu.contract_precision<fp32>} : vector<16x32xf32>, vector<32x128xf32>, vector<16x128xf32> -> vector<16x128xf32>
    %c0_3 = arith.constant 0 : index
    %c0_4 = arith.constant 0 : index
    %8 = vector.load %arg3[%c0_3, %c0_4] : memref<16x128xf32, #tpu.memory_space<vmem>>, vector<16x128xf32>
    tpu.vector_store %arg3[%c0_3, %c0_4], %7 {strides = array<i32>} : memref<16x128xf32, #tpu.memory_space<vmem>>, vector<16x128xf32>,
    return
  }
  func.func @transform_0(%arg0: i32) -> (i32, i32) {
    %c0_i32 = arith.constant 0 : i32
    %c0_i32_0 = arith.constant 0 : i32
    return %arg0, %c0_i32 : i32, i32
  }
  func.func @transform_1(%arg0: i32) -> (i32, i32) {
    %c0_i32 = arith.constant 0 : i32
    %c0_i32_0 = arith.constant 0 : i32
    %c0_i32_1 = arith.constant 0 : i32
    return %c0_i32, %c0_i32_0 : i32, i32
  }
  func.func @transform_2(%arg0: i32) -> (i32, i32) {
    %c0_i32 = arith.constant 0 : i32
    %c0_i32_0 = arith.constant 0 : i32
    return %arg0, %c0_i32 : i32, i32
  }
}

module attributes {stable_mosaic.version = 11 : i64} {
  func.func @_onehot_gather_kernel(%arg0: i32, %arg1: memref<16x1xi32, #tpu.memory_space<vmem>>, %arg2: memref<32x128xf32, #tpu.memory_space<vmem>>, %arg3: memref<16x128xf32, #tpu.memory_space<vmem>>) attributes {dimension_semantics = [#tpu.dimension_semantics<parallel>], iteration_bounds = array<i64: 1>, scalar_prefetch = 0 : i64, scratch_operands = 0 : i64, tpu.core_type = #tpu.core_type<tc>, window_params = [{transform_indices = @transform_0, window_bounds = array<i64: 16, 1>}, {pipeline_mode = #tpu.pipeline_mode<synchronous>, transform_indices = @transform_1, window_bounds = array<i64: 32, 128>}, {transform_indices = @transform_2, window_bounds = array<i64: 16, 128>}]} {
    %c0 = arith.constant 0 : index
    %c0_0 = arith.constant 0 : index
    %0 = vector.load %arg1[%c0, %c0_0] : memref<16x1xi32, #tpu.memory_space<vmem>>, vector<16x1xi32>
    %1 = tpu.iota {dimensions = array<i32: 1>} : vector<16x32xi32>
    %2 = vector.broadcast %0 : vector<16x1xi32> to vector<16x32xi32>
    %3 = arith.cmpi eq, %1, %2 : vector<16x32xi32>
    %4 = arith.extui %3 : vector<16x32xi1> to vector<16x32xi32>
    %5 = arith.sitofp %4 : vector<16x32xi32> to vector<16x32xf32>
    %c0_1 = arith.constant 0 : index
    %c0_2 = arith.constant 0 : index
    %6 = vector.load %arg2[%c0_1, %c0_2] : memref<32x128xf32, #tpu.memory_space<vmem>>, vector<32x128xf32>
    %cst = arith.constant dense<0.000000e+00> : vector<16x128xf32>
    %7 = tpu.matmul %5, %6, %cst {dimension_numbers = #tpu.dot_dimension_numbers<[1], [0], [0], [1], [0, 0, 1, 1], [], []>} : vector<16x32xf32>, vector<32x128xf32>, vector<16x128xf32> -> vector<16x128xf32>
    %c0_3 = arith.constant 0 : index
    %c0_4 = arith.constant 0 : index
    %8 = vector.load %arg3[%c0_3, %c0_4] : memref<16x128xf32, #tpu.memory_space<vmem>>, vector<16x128xf32>
    tpu.vector_store %arg3[%c0_3, %c0_4], %7 {strides = array<i32>} : memref<16x128xf32, #tpu.memory_space<vmem>>, vector<16x128xf32>,
    return
  }
  func.func @transform_0(%arg0: i32) -> (i32, i32) {
    %c0_i32 = arith.constant 0 : i32
    %c0_i32_0 = arith.constant 0 : i32
    return %arg0, %c0_i32 : i32, i32
  }
  func.func @transform_1(%arg0: i32) -> (i32, i32) {
    %c0_i32 = arith.constant 0 : i32
    %c0_i32_0 = arith.constant 0 : i32
    %c0_i32_1 = arith.constant 0 : i32
    return %c0_i32, %c0_i32_0 : i32, i32
  }
  func.func @transform_2(%arg0: i32) -> (i32, i32) {
    %c0_i32 = arith.constant 0 : i32
    %c0_i32_0 = arith.constant 0 : i32
    return %arg0, %c0_i32 : i32, i32
  }
}

</mosaic_0001>

<llo_original>
// kernel: tpu_custom_call.1
$region0: #{tpu_custom_call.1}
  #allocation0 [shape = 'u32[]', space=smem, size = 0x4, offset = 0x4, fixed_abs, tag = 'smem constant byte address 0x4 - core index']
  #allocation1 [shape = 'u32[144,128]{1,0:T(1,128)}', space=vmem, size = 0x12000, scoped, tag = 'internal scratch']
  %s0 = inlined_call_operand.vmem [shape: s32[16,1], index: 0, kind: input, shape index: {}]
  %s1 = inlined_call_operand.hbm [shape: f32[32,128], index: 1, kind: input, shape index: {}]
  %s2 = inlined_call_operand.hbm [shape: f32[16,128], index: 2, kind: output, shape index: {}]
  %s3 = sld [smem:[#allocation0]]
  $region22: #{tpu_custom_call.1} parent=0
    _
  %s5 = ssub.s32 1, %s3
  %s6 = scalar_select 0, %s5, %s3
  $region1: #{tpu_custom_call.1} parent=0
    #allocation2 [shape = 'u8[16384]{0}', space=vmem, size = 0x4000, scoped, tag = 'input window, operand 1, single buffered']
    #allocation3 [shape = 's32[1]{0}', space=sflag, size = 0x4, scoped, tag = 'scoped memory for tpu_custom_call.1']
    #allocation4 [shape = 's32[1]{0}', space=sflag, size = 0x4, scoped, tag = 'scoped memory for tpu_custom_call.1']
    #allocation5 [shape = 'u8[8192]{0}', space=vmem, size = 0x2000, scoped, tag = 'output window, operand 0, single buffered']
    %7 = vsyncpa [#allocation3], 0
    %8 = vsyncpa [#allocation4], 0
    // Predicated region
    $region2: #{tpu_custom_call.1} parent=1 // pred_check
      _
    $region3: #{tpu_custom_call.1} parent=1 // pred_check_branch
      %10 = sbr.rel (0) target = $region5
    $region4: #{tpu_custom_call.1} parent=1 // pred_region
      _
    $region5: #{tpu_custom_call.1} parent=1 // pred_fallthru
      _
    // Predicated region
    $region6: #{tpu_custom_call.1} parent=1 // pred_check
      _
    $region7: #{tpu_custom_call.1} parent=1 // pred_check_branch
      %12 = sbr.rel (0) target = $region9
    $region8: #{tpu_custom_call.1} parent=1 // pred_region
      %s14 = ssub.s32 512, 512
      %15 = vsyncadd [#allocation3], %s14
      %s16 = sshll.u32 [#allocation2], 4
      %s17 = int_to_ptr.vmem [resolvable:$true] %s16
      %22 = dma.hbm_to_vmem [thread:$0]  %s1, 512, %s17, [#allocation3], 128, 128, 8
    $region9: #{tpu_custom_call.1} parent=1 // pred_fallthru
      _
    // Predicated region
    $region10: #{tpu_custom_call.1} parent=1 // pred_check
      _
    $region11: #{tpu_custom_call.1} parent=1 // pred_check_branch
      %24 = sbr.rel (0) target = $region13
    $region12: #{tpu_custom_call.1} parent=1 // pred_region
      %25 = dma.done [#allocation3], 512
    $region13: #{tpu_custom_call.1} parent=1 // pred_fallthru
      _
    %v26 = vld [vmem:[%s0] sm:$0xff]
    %v27 = vld [vmem:[%s0 + $0x8] sm:$0xff]
    %v28 = vlaneseq
    %v29 = vand.u32 %v28, 127
    %30 = vset.pattern.permute.xlu0 0
    %31 = vperm.xlu0 %30, %v26
    %v32 = vpop.permute.xlu0 %31
    %33 = vset.pattern.permute.xlu0 0
    %34 = vperm.xlu0 %33, %v27
    %v35 = vpop.permute.xlu0 %34
    %vm36 = vcmp.eq.s32.totalorder %v29, %v32
    %vm37 = vcmp.eq.s32.totalorder %v29, %v35
    %v38 = vsel %vm36, 1, 0
    %v39 = vsel %vm37, 1, 0
    %v40 = vcvt.s32.f32 %v38
    %v41 = vcvt.s32.f32 %v39
    %v42 = vld [vmem:[#allocation2] sm:$0xff]
    %v43 = vld [vmem:[#allocation2 + $0x8] sm:$0xff]
    %v44 = vld [vmem:[#allocation2 + $0x10] sm:$0xff]
    %v45 = vld [vmem:[#allocation2 + $0x18] sm:$0xff]
    %vm46 = vcmask 261120
    %v48 = vsel %vm46, %v40, 0
    %v51 = vsel %vm46, %v41, 0
    %53 = vmatprep.subr.mxu0 0.0
    %54 = vmatpush1.msra.mxu0 0.0
    %55 = vmatprep.subr.mxu0 0.0
    %56 = vmatpush1.msra.mxu0 0.0
    %57 = vmatprep.subr.mxu0 0.0
    %58 = vmatpush1.msra.mxu0 0.0
    %59 = vmatprep.subr.mxu0 0.0
    %60 = vmatpush1.msra.mxu0 0.0
    %61 = vmatprep.subr.mxu0 0.0
    %62 = vmatpush1.msra.mxu0 0.0
    %63 = vmatprep.subr.mxu0 0.0
    %64 = vmatpush1.msra.mxu0 0.0
    %65 = vmatprep.subr.mxu0 0.0
    %66 = vmatpush1.msra.mxu0 0.0
    %67 = vmatprep.subr.mxu0 0.0
    %68 = vmatpush1.msra.mxu0 0.0
    %69 = vmatprep.subr.mxu0 0.0
    %70 = vmatpush1.msra.mxu0 0.0
    %71 = vmatprep.subr.mxu0 0.0
    %72 = vmatpush1.msra.mxu0 0.0
    %73 = vmatprep.subr.mxu0 0.0
    %74 = vmatpush1.msra.mxu0 0.0
    %75 = vmatprep.subr.mxu0 0.0
    %76 = vmatpush1.msra.mxu0 0.0
    %77 = vmatprep.subr.mxu0 0.0
    %v78 = vand.u32 %v45, 4294901760
    %79 = vmatpush1.msra.mxu0 %v78
    %80 = vmatprep.subr.mxu0 0.0
    %v81 = vand.u32 %v44, 4294901760
    %82 = vmatpush1.msra.mxu0 %v81
    %83 = vmatprep.subr.mxu0 0.0
    %v84 = vand.u32 %v43, 4294901760
    %85 = vmatpush1.msra.mxu0 %v84
    %86 = vmatprep.subr.mxu0 0.0
    %v87 = vand.u32 %v42, 4294901760
    %88 = vmatpush1.msra.mxu0 %v87
    %89 = vmatprep.subr.mxu0 0.0
    %90 = vmatpush2.msra.mxu0 0.0
    %91 = vmatprep.subr.mxu0 0.0
    %92 = vmatpush2.msra.mxu0 0.0
    %93 = vmatprep.subr.mxu0 0.0
    %94 = vmatpush2.msra.mxu0 0.0
    %95 = vmatprep.subr.mxu0 0.0
    %96 = vmatpush2.msra.mxu0 0.0
    %97 = vmatprep.subr.mxu0 0.0
    %98 = vmatpush2.msra.mxu0 0.0
    %99 = vmatprep.subr.mxu0 0.0
    %100 = vmatpush2.msra.mxu0 0.0
    %101 = vmatprep.subr.mxu0 0.0
    %102 = vmatpush2.msra.mxu0 0.0
    %103 = vmatprep.subr.mxu0 0.0
    %104 = vmatpush2.msra.mxu0 0.0
    %105 = vmatprep.subr.mxu0 0.0
    %106 = vmatpush2.msra.mxu0 0.0
    %107 = vmatprep.subr.mxu0 0.0
    %108 = vmatpush2.msra.mxu0 0.0
    %109 = vmatprep.subr.mxu0 0.0
    %110 = vmatpush2.msra.mxu0 0.0
    %111 = vmatprep.subr.mxu0 0.0
    %112 = vmatpush2.msra.mxu0 0.0
    %113 = vmatprep.subr.mxu0 0.0
    %114 = vmatpush2.msra.mxu0 0.0
    %115 = vmatprep.subr.mxu0 0.0
    %116 = vmatpush2.msra.mxu0 0.0
    %117 = vmatprep.subr.mxu0 0.0
    %118 = vmatpush2.msra.mxu0 0.0
    %119 = vmatprep.subr.mxu0 0.0
    %120 = vmatpush2.msra.mxu0 0.0
    %121 = vmatprep.mubr.f32.mxu0 0.0
    %v122 = vand.u32 %v48, 4294901760
    %v123 = vsub.f32 %v48, %v122
    %v124 = vand.u32 %v123, 4294901760
    %v125 = vsub.f32 %v123, %v124
    %v126 = vand.u32 %v125, 4294901760
    %127 = vmatmul.mubr.f32.gmra.mxu0 %v126
    %v128 = vpop.f32.mrf.mxu0
    %v129 = vadd.f32 0.0, %v128
    %v130 = vpop.f32.mrf.mxu0
    %131 = vmatprep.mubr.f32.mxu0 0.0
    %v132 = vand.u32 %v51, 4294901760
    %v133 = vsub.f32 %v51, %v132
    %v134 = vand.u32 %v133, 4294901760
    %v135 = vsub.f32 %v133, %v134
    %v136 = vand.u32 %v135, 4294901760
    %137 = vmatmul.mubr.f32.gmra.mxu0 %v136
    %v138 = vpop.f32.mrf.mxu0
    %v139 = vadd.f32 0.0, %v138
    %v140 = vpop.f32.mrf.mxu0
    %141 = vdwg.mxu0
    %142 = vmatprep.subr.mxu0 0.0
    %143 = vmatpush1.msra.mxu0 0.0
    %144 = vmatprep.subr.mxu0 0.0
    %145 = vmatpush1.msra.mxu0 0.0
    %146 = vmatprep.subr.mxu0 0.0
    %147 = vmatpush1.msra.mxu0 0.0
    %148 = vmatprep.subr.mxu0 0.0
    %149 = vmatpush1.msra.mxu0 0.0
    %150 = vmatprep.subr.mxu0 0.0
    %151 = vmatpush1.msra.mxu0 0.0
    %152 = vmatprep.subr.mxu0 0.0
    %153 = vmatpush1.msra.mxu0 0.0
    %154 = vmatprep.subr.mxu0 0.0
    %155 = vmatpush1.msra.mxu0 0.0
    %156 = vmatprep.subr.mxu0 0.0
    %157 = vmatpush1.msra.mxu0 0.0
    %158 = vmatprep.subr.mxu0 0.0
    %159 = vmatpush1.msra.mxu0 0.0
    %160 = vmatprep.subr.mxu0 0.0
    %161 = vmatpush1.msra.mxu0 0.0
    %162 = vmatprep.subr.mxu0 0.0
    %163 = vmatpush1.msra.mxu0 0.0
    %164 = vmatprep.subr.mxu0 0.0
    %165 = vmatpush1.msra.mxu0 0.0
    %166 = vmatprep.subr.mxu0 0.0
    %v167 = vand.u32 %v45, 4294901760
    %v168 = vsub.f32 %v45, %v167
    %v169 = vand.u32 %v168, 4294901760
    %v170 = vsub.f32 %v168, %v169
    %v171 = vand.u32 %v170, 4294901760
    %172 = vmatpush1.msra.mxu0 %v171
    %173 = vmatprep.subr.mxu0 0.0
    %v174 = vand.u32 %v44, 4294901760
    %v175 = vsub.f32 %v44, %v174
    %v176 = vand.u32 %v175, 4294901760
    %v177 = vsub.f32 %v175, %v176
    %v178 = vand.u32 %v177, 4294901760
    %179 = vmatpush1.msra.mxu0 %v178
    %180 = vmatprep.subr.mxu0 0.0
    %v181 = vand.u32 %v43, 4294901760
    %v182 = vsub.f32 %v43, %v181
    %v183 = vand.u32 %v182, 4294901760
    %v184 = vsub.f32 %v182, %v183
    %v185 = vand.u32 %v184, 4294901760
    %186 = vmatpush1.msra.mxu0 %v185
    %187 = vmatprep.subr.mxu0 0.0
    %v188 = vand.u32 %v42, 4294901760
    %v189 = vsub.f32 %v42, %v188
    %v190 = vand.u32 %v189, 4294901760
    %v191 = vsub.f32 %v189, %v190
    %v192 = vand.u32 %v191, 4294901760
    %193 = vmatpush1.msra.mxu0 %v192
    %194 = vmatprep.subr.mxu0 0.0
    %195 = vmatpush2.msra.mxu0 0.0
    %196 = vmatprep.subr.mxu0 0.0
    %197 = vmatpush2.msra.mxu0 0.0
    %198 = vmatprep.subr.mxu0 0.0
    %199 = vmatpush2.msra.mxu0 0.0
    %200 = vmatprep.subr.mxu0 0.0
    %201 = vmatpush2.msra.mxu0 0.0
    %202 = vmatprep.subr.mxu0 0.0
    %203 = vmatpush2.msra.mxu0 0.0
    %204 = vmatprep.subr.mxu0 0.0
    %205 = vmatpush2.msra.mxu0 0.0
    %206 = vmatprep.subr.mxu0 0.0
    %207 = vmatpush2.msra.mxu0 0.0
    %208 = vmatprep.subr.mxu0 0.0
    %209 = vmatpush2.msra.mxu0 0.0
    %210 = vmatprep.subr.mxu0 0.0
    %211 = vmatpush2.msra.mxu0 0.0
    %212 = vmatprep.subr.mxu0 0.0
    %213 = vmatpush2.msra.mxu0 0.0
    %214 = vmatprep.subr.mxu0 0.0
    %215 = vmatpush2.msra.mxu0 0.0
    %216 = vmatprep.subr.mxu0 0.0
    %217 = vmatpush2.msra.mxu0 0.0
    %218 = vmatprep.subr.mxu0 0.0
    %219 = vmatpush2.msra.mxu0 0.0
    %220 = vmatprep.subr.mxu0 0.0
    %221 = vmatpush2.msra.mxu0 0.0
    %222 = vmatprep.subr.mxu0 0.0
    %223 = vmatpush2.msra.mxu0 0.0
    %224 = vmatprep.subr.mxu0 0.0
    %225 = vmatpush2.msra.mxu0 0.0
    %226 = vmatprep.mubr.f32.mxu0 0.0
    %v227 = vand.u32 %v48, 4294901760
    %228 = vmatmul.mubr.f32.gmra.mxu0 %v227
    %v229 = vpop.f32.mrf.mxu0
    %v230 = vadd.f32 %v129, %v229
    %v231 = vpop.f32.mrf.mxu0
    %232 = vmatprep.mubr.f32.mxu0 0.0
    %v233 = vand.u32 %v51, 4294901760
    %234 = vmatmul.mubr.f32.gmra.mxu0 %v233
    %v235 = vpop.f32.mrf.mxu0
    %v236 = vadd.f32 %v139, %v235
    %v237 = vpop.f32.mrf.mxu0
    %238 = vdwg.mxu0
    %239 = vmatprep.subr.mxu0 0.0
    %240 = vmatpush1.msra.mxu0 0.0
    %241 = vmatprep.subr.mxu0 0.0
    %242 = vmatpush1.msra.mxu0 0.0
    %243 = vmatprep.subr.mxu0 0.0
    %244 = vmatpush1.msra.mxu0 0.0
    %245 = vmatprep.subr.mxu0 0.0
    %246 = vmatpush1.msra.mxu0 0.0
    %247 = vmatprep.subr.mxu0 0.0
    %248 = vmatpush1.msra.mxu0 0.0
    %249 = vmatprep.subr.mxu0 0.0
    %250 = vmatpush1.msra.mxu0 0.0
    %251 = vmatprep.subr.mxu0 0.0
    %252 = vmatpush1.msra.mxu0 0.0
    %253 = vmatprep.subr.mxu0 0.0
    %254 = vmatpush1.msra.mxu0 0.0
    %255 = vmatprep.subr.mxu0 0.0
    %256 = vmatpush1.msra.mxu0 0.0
    %257 = vmatprep.subr.mxu0 0.0
    %258 = vmatpush1.msra.mxu0 0.0
    %259 = vmatprep.subr.mxu0 0.0
    %260 = vmatpush1.msra.mxu0 0.0
    %261 = vmatprep.subr.mxu0 0.0
    %262 = vmatpush1.msra.mxu0 0.0
    %263 = vmatprep.subr.mxu0 0.0
    %v264 = vand.u32 %v45, 4294901760
    %v265 = vsub.f32 %v45, %v264
    %266 = vmatpush1.msra.mxu0 %v265
    %267 = vmatprep.subr.mxu0 0.0
    %v268 = vand.u32 %v44, 4294901760
    %v269 = vsub.f32 %v44, %v268
    %270 = vmatpush1.msra.mxu0 %v269
    %271 = vmatprep.subr.mxu0 0.0
    %v272 = vand.u32 %v43, 4294901760
    %v273 = vsub.f32 %v43, %v272
    %274 = vmatpush1.msra.mxu0 %v273
    %275 = vmatprep.subr.mxu0 0.0
    %v276 = vand.u32 %v42, 4294901760
    %v277 = vsub.f32 %v42, %v276
    %278 = vmatpush1.msra.mxu0 %v277
    %279 = vmatprep.subr.mxu0 0.0
    %280 = vmatpush2.msra.mxu0 0.0
    %281 = vmatprep.subr.mxu0 0.0
    %282 = vmatpush2.msra.mxu0 0.0
    %283 = vmatprep.subr.mxu0 0.0
    %284 = vmatpush2.msra.mxu0 0.0
    %285 = vmatprep.subr.mxu0 0.0
    %286 = vmatpush2.msra.mxu0 0.0
    %287 = vmatprep.subr.mxu0 0.0
    %288 = vmatpush2.msra.mxu0 0.0
    %289 = vmatprep.subr.mxu0 0.0
    %290 = vmatpush2.msra.mxu0 0.0
    %291 = vmatprep.subr.mxu0 0.0
    %292 = vmatpush2.msra.mxu0 0.0
    %293 = vmatprep.subr.mxu0 0.0
    %294 = vmatpush2.msra.mxu0 0.0
    %295 = vmatprep.subr.mxu0 0.0
    %296 = vmatpush2.msra.mxu0 0.0
    %297 = vmatprep.subr.mxu0 0.0
    %298 = vmatpush2.msra.mxu0 0.0
    %299 = vmatprep.subr.mxu0 0.0
    %300 = vmatpush2.msra.mxu0 0.0
    %301 = vmatprep.subr.mxu0 0.0
    %302 = vmatpush2.msra.mxu0 0.0
    %303 = vmatprep.subr.mxu0 0.0
    %304 = vmatpush2.msra.mxu0 0.0
    %305 = vmatprep.subr.mxu0 0.0
    %306 = vmatpush2.msra.mxu0 0.0
    %307 = vmatprep.subr.mxu0 0.0
    %308 = vmatpush2.msra.mxu0 0.0
    %309 = vmatprep.subr.mxu0 0.0
    %310 = vmatpush2.msra.mxu0 0.0
    %311 = vmatprep.mubr.f32.mxu0 0.0
    %v312 = vand.u32 %v48, 4294901760
    %v313 = vsub.f32 %v48, %v312
    %314 = vmatmul.mubr.f32.gmra.mxu0 %v313
    %v315 = vpop.f32.mrf.mxu0
    %v316 = vadd.f32 %v230, %v315
    %v317 = vpop.f32.mrf.mxu0
    %318 = vmatprep.mubr.f32.mxu0 0.0
    %v319 = vand.u32 %v51, 4294901760
    %v320 = vsub.f32 %v51, %v319
    %321 = vmatmul.mubr.f32.gmra.mxu0 %v320
    %v322 = vpop.f32.mrf.mxu0
    %v323 = vadd.f32 %v236, %v322
    %v324 = vpop.f32.mrf.mxu0
    %325 = vdwg.mxu0
    %326 = vmatprep.subr.mxu0 0.0
    %327 = vmatpush1.msra.mxu0 0.0
    %328 = vmatprep.subr.mxu0 0.0
    %329 = vmatpush1.msra.mxu0 0.0
    %330 = vmatprep.subr.mxu0 0.0
    %331 = vmatpush1.msra.mxu0 0.0
    %332 = vmatprep.subr.mxu0 0.0
    %333 = vmatpush1.msra.mxu0 0.0
    %334 = vmatprep.subr.mxu0 0.0
    %335 = vmatpush1.msra.mxu0 0.0
    %336 = vmatprep.subr.mxu0 0.0
    %337 = vmatpush1.msra.mxu0 0.0
    %338 = vmatprep.subr.mxu0 0.0
    %339 = vmatpush1.msra.mxu0 0.0
    %340 = vmatprep.subr.mxu0 0.0
    %341 = vmatpush1.msra.mxu0 0.0
    %342 = vmatprep.subr.mxu0 0.0
    %343 = vmatpush1.msra.mxu0 0.0
    %344 = vmatprep.subr.mxu0 0.0
    %345 = vmatpush1.msra.mxu0 0.0
    %346 = vmatprep.subr.mxu0 0.0
    %347 = vmatpush1.msra.mxu0 0.0
    %348 = vmatprep.subr.mxu0 0.0
    %349 = vmatpush1.msra.mxu0 0.0
    %350 = vmatprep.subr.mxu0 0.0
    %v351 = vand.u32 %v45, 4294901760
    %352 = vmatpush1.msra.mxu0 %v351
    %353 = vmatprep.subr.mxu0 0.0
    %v354 = vand.u32 %v44, 4294901760
    %355 = vmatpush1.msra.mxu0 %v354
    %356 = vmatprep.subr.mxu0 0.0
    %v357 = vand.u32 %v43, 4294901760
    %358 = vmatpush1.msra.mxu0 %v357
    %359 = vmatprep.subr.mxu0 0.0
    %v360 = vand.u32 %v42, 4294901760
    %361 = vmatpush1.msra.mxu0 %v360
    %362 = vmatprep.subr.mxu0 0.0
    %363 = vmatpush2.msra.mxu0 0.0
    %364 = vmatprep.subr.mxu0 0.0
    %365 = vmatpush2.msra.mxu0 0.0
    %366 = vmatprep.subr.mxu0 0.0
    %367 = vmatpush2.msra.mxu0 0.0
    %368 = vmatprep.subr.mxu0 0.0
    %369 = vmatpush2.msra.mxu0 0.0
    %370 = vmatprep.subr.mxu0 0.0
    %371 = vmatpush2.msra.mxu0 0.0
    %372 = vmatprep.subr.mxu0 0.0
    %373 = vmatpush2.msra.mxu0 0.0
    %374 = vmatprep.subr.mxu0 0.0
    %375 = vmatpush2.msra.mxu0 0.0
    %376 = vmatprep.subr.mxu0 0.0
    %377 = vmatpush2.msra.mxu0 0.0
    %378 = vmatprep.subr.mxu0 0.0
    %379 = vmatpush2.msra.mxu0 0.0
    %380 = vmatprep.subr.mxu0 0.0
    %381 = vmatpush2.msra.mxu0 0.0
    %382 = vmatprep.subr.mxu0 0.0
    %383 = vmatpush2.msra.mxu0 0.0
    %384 = vmatprep.subr.mxu0 0.0
    %385 = vmatpush2.msra.mxu0 0.0
    %386 = vmatprep.subr.mxu0 0.0
    %387 = vmatpush2.msra.mxu0 0.0
    %388 = vmatprep.subr.mxu0 0.0
    %389 = vmatpush2.msra.mxu0 0.0
    %390 = vmatprep.subr.mxu0 0.0
    %391 = vmatpush2.msra.mxu0 0.0
    %392 = vmatprep.subr.mxu0 0.0
    %393 = vmatpush2.msra.mxu0 0.0
    %394 = vmatprep.mubr.f32.mxu0 0.0
    %v395 = vand.u32 %v48, 4294901760
    %v396 = vsub.f32 %v48, %v395
    %v397 = vand.u32 %v396, 4294901760
    %398 = vmatmul.mubr.f32.gmra.mxu0 %v397
    %v399 = vpop.f32.mrf.mxu0
    %v400 = vadd.f32 %v316, %v399
    %v401 = vpop.f32.mrf.mxu0
    %402 = vmatprep.mubr.f32.mxu0 0.0
    %v403 = vand.u32 %v51, 4294901760
    %v404 = vsub.f32 %v51, %v403
    %v405 = vand.u32 %v404, 4294901760
    %406 = vmatmul.mubr.f32.gmra.mxu0 %v405
    %v407 = vpop.f32.mrf.mxu0
    %v408 = vadd.f32 %v323, %v407
    %v409 = vpop.f32.mrf.mxu0
    %410 = vdwg.mxu0
    %411 = vmatprep.subr.mxu0 0.0
    %412 = vmatpush1.msra.mxu0 0.0
    %413 = vmatprep.subr.mxu0 0.0
    %414 = vmatpush1.msra.mxu0 0.0
    %415 = vmatprep.subr.mxu0 0.0
    %416 = vmatpush1.msra.mxu0 0.0
    %417 = vmatprep.subr.mxu0 0.0
    %418 = vmatpush1.msra.mxu0 0.0
    %419 = vmatprep.subr.mxu0 0.0
    %420 = vmatpush1.msra.mxu0 0.0
    %421 = vmatprep.subr.mxu0 0.0
    %422 = vmatpush1.msra.mxu0 0.0
    %423 = vmatprep.subr.mxu0 0.0
    %424 = vmatpush1.msra.mxu0 0.0
    %425 = vmatprep.subr.mxu0 0.0
    %426 = vmatpush1.msra.mxu0 0.0
    %427 = vmatprep.subr.mxu0 0.0
    %428 = vmatpush1.msra.mxu0 0.0
    %429 = vmatprep.subr.mxu0 0.0
    %430 = vmatpush1.msra.mxu0 0.0
    %431 = vmatprep.subr.mxu0 0.0
    %432 = vmatpush1.msra.mxu0 0.0
    %433 = vmatprep.subr.mxu0 0.0
    %434 = vmatpush1.msra.mxu0 0.0
    %435 = vmatprep.subr.mxu0 0.0
    %v436 = vand.u32 %v45, 4294901760
    %v437 = vsub.f32 %v45, %v436
    %v438 = vand.u32 %v437, 4294901760
    %439 = vmatpush1.msra.mxu0 %v438
    %440 = vmatprep.subr.mxu0 0.0
    %v441 = vand.u32 %v44, 4294901760
    %v442 = vsub.f32 %v44, %v441
    %v443 = vand.u32 %v442, 4294901760
    %444 = vmatpush1.msra.mxu0 %v443
    %445 = vmatprep.subr.mxu0 0.0
    %v446 = vand.u32 %v43, 4294901760
    %v447 = vsub.f32 %v43, %v446
    %v448 = vand.u32 %v447, 4294901760
    %449 = vmatpush1.msra.mxu0 %v448
    %450 = vmatprep.subr.mxu0 0.0
    %v451 = vand.u32 %v42, 4294901760
    %v452 = vsub.f32 %v42, %v451
    %v453 = vand.u32 %v452, 4294901760
    %454 = vmatpush1.msra.mxu0 %v453
    %455 = vmatprep.subr.mxu0 0.0
    %456 = vmatpush2.msra.mxu0 0.0
    %457 = vmatprep.subr.mxu0 0.0
    %458 = vmatpush2.msra.mxu0 0.0
    %459 = vmatprep.subr.mxu0 0.0
    %460 = vmatpush2.msra.mxu0 0.0
    %461 = vmatprep.subr.mxu0 0.0
    %462 = vmatpush2.msra.mxu0 0.0
    %463 = vmatprep.subr.mxu0 0.0
    %464 = vmatpush2.msra.mxu0 0.0
    %465 = vmatprep.subr.mxu0 0.0
    %466 = vmatpush2.msra.mxu0 0.0
    %467 = vmatprep.subr.mxu0 0.0
    %468 = vmatpush2.msra.mxu0 0.0
    %469 = vmatprep.subr.mxu0 0.0
    %470 = vmatpush2.msra.mxu0 0.0
    %471 = vmatprep.subr.mxu0 0.0
    %472 = vmatpush2.msra.mxu0 0.0
    %473 = vmatprep.subr.mxu0 0.0
    %474 = vmatpush2.msra.mxu0 0.0
    %475 = vmatprep.subr.mxu0 0.0
    %476 = vmatpush2.msra.mxu0 0.0
    %477 = vmatprep.subr.mxu0 0.0
    %478 = vmatpush2.msra.mxu0 0.0
    %479 = vmatprep.subr.mxu0 0.0
    %480 = vmatpush2.msra.mxu0 0.0
    %481 = vmatprep.subr.mxu0 0.0
    %482 = vmatpush2.msra.mxu0 0.0
    %483 = vmatprep.subr.mxu0 0.0
    %484 = vmatpush2.msra.mxu0 0.0
    %485 = vmatprep.subr.mxu0 0.0
    %486 = vmatpush2.msra.mxu0 0.0
    %487 = vmatprep.mubr.f32.mxu0 0.0
    %v488 = vand.u32 %v48, 4294901760
    %489 = vmatmul.mubr.f32.gmra.mxu0 %v488
    %v490 = vpop.f32.mrf.mxu0
    %v491 = vadd.f32 %v400, %v490
    %v492 = vpop.f32.mrf.mxu0
    %493 = vmatprep.mubr.f32.mxu0 0.0
    %v494 = vand.u32 %v51, 4294901760
    %495 = vmatmul.mubr.f32.gmra.mxu0 %v494
    %v496 = vpop.f32.mrf.mxu0
    %v497 = vadd.f32 %v408, %v496
    %v498 = vpop.f32.mrf.mxu0
    %499 = vdwg.mxu0
    %500 = vmatprep.subr.mxu0 0.0
    %501 = vmatpush1.msra.mxu0 0.0
    %502 = vmatprep.subr.mxu0 0.0
    %503 = vmatpush1.msra.mxu0 0.0
    %504 = vmatprep.subr.mxu0 0.0
    %505 = vmatpush1.msra.mxu0 0.0
    %506 = vmatprep.subr.mxu0 0.0
    %507 = vmatpush1.msra.mxu0 0.0
    %508 = vmatprep.subr.mxu0 0.0
    %509 = vmatpush1.msra.mxu0 0.0
    %510 = vmatprep.subr.mxu0 0.0
    %511 = vmatpush1.msra.mxu0 0.0
    %512 = vmatprep.subr.mxu0 0.0
    %513 = vmatpush1.msra.mxu0 0.0
    %514 = vmatprep.subr.mxu0 0.0
    %515 = vmatpush1.msra.mxu0 0.0
    %516 = vmatprep.subr.mxu0 0.0
    %517 = vmatpush1.msra.mxu0 0.0
    %518 = vmatprep.subr.mxu0 0.0
    %519 = vmatpush1.msra.mxu0 0.0
    %520 = vmatprep.subr.mxu0 0.0
    %521 = vmatpush1.msra.mxu0 0.0
    %522 = vmatprep.subr.mxu0 0.0
    %523 = vmatpush1.msra.mxu0 0.0
    %524 = vmatprep.subr.mxu0 0.0
    %v525 = vand.u32 %v45, 4294901760
    %526 = vmatpush1.msra.mxu0 %v525
    %527 = vmatprep.subr.mxu0 0.0
    %v528 = vand.u32 %v44, 4294901760
    %529 = vmatpush1.msra.mxu0 %v528
    %530 = vmatprep.subr.mxu0 0.0
    %v531 = vand.u32 %v43, 4294901760
    %532 = vmatpush1.msra.mxu0 %v531
    %533 = vmatprep.subr.mxu0 0.0
    %v534 = vand.u32 %v42, 4294901760
    %535 = vmatpush1.msra.mxu0 %v534
    %536 = vmatprep.subr.mxu0 0.0
    %537 = vmatpush2.msra.mxu0 0.0
    %538 = vmatprep.subr.mxu0 0.0
    %539 = vmatpush2.msra.mxu0 0.0
    %540 = vmatprep.subr.mxu0 0.0
    %541 = vmatpush2.msra.mxu0 0.0
    %542 = vmatprep.subr.mxu0 0.0
    %543 = vmatpush2.msra.mxu0 0.0
    %544 = vmatprep.subr.mxu0 0.0
    %545 = vmatpush2.msra.mxu0 0.0
    %546 = vmatprep.subr.mxu0 0.0
    %547 = vmatpush2.msra.mxu0 0.0
    %548 = vmatprep.subr.mxu0 0.0
    %549 = vmatpush2.msra.mxu0 0.0
    %550 = vmatprep.subr.mxu0 0.0
    %551 = vmatpush2.msra.mxu0 0.0
    %552 = vmatprep.subr.mxu0 0.0
    %553 = vmatpush2.msra.mxu0 0.0
    %554 = vmatprep.subr.mxu0 0.0
    %555 = vmatpush2.msra.mxu0 0.0
    %556 = vmatprep.subr.mxu0 0.0
    %557 = vmatpush2.msra.mxu0 0.0
    %558 = vmatprep.subr.mxu0 0.0
    %559 = vmatpush2.msra.mxu0 0.0
    %560 = vmatprep.subr.mxu0 0.0
    %561 = vmatpush2.msra.mxu0 0.0
    %562 = vmatprep.subr.mxu0 0.0
    %563 = vmatpush2.msra.mxu0 0.0
    %564 = vmatprep.subr.mxu0 0.0
    %565 = vmatpush2.msra.mxu0 0.0
    %566 = vmatprep.subr.mxu0 0.0
    %567 = vmatpush2.msra.mxu0 0.0
    %568 = vmatprep.mubr.f32.mxu0 0.0
    %v569 = vand.u32 %v48, 4294901760
    %570 = vmatmul.mubr.f32.gmra.mxu0 %v569
    %v571 = vpop.f32.mrf.mxu0
    %v572 = vadd.f32 %v491, %v571
    %v573 = vpop.f32.mrf.mxu0
    %574 = vmatprep.mubr.f32.mxu0 0.0
    %v575 = vand.u32 %v51, 4294901760
    %576 = vmatmul.mubr.f32.gmra.mxu0 %v575
    %v577 = vpop.f32.mrf.mxu0
    %v578 = vadd.f32 %v497, %v577
    %v579 = vpop.f32.mrf.mxu0
    %580 = vdwg.mxu0
    %581 = vst [vmem:[#allocation5] sm:$0xff] %v572
    %582 = vst [vmem:[#allocation5 + $0x8] sm:$0xff] %v578
    // Predicated region
    $region14: #{tpu_custom_call.1} parent=1 // pred_check
      _
    $region15: #{tpu_custom_call.1} parent=1 // pred_check_branch
      %584 = sbr.rel (0) target = $region17
    $region16: #{tpu_custom_call.1} parent=1 // pred_region
      %s586 = ssub.s32 256, 256
      %587 = vsyncadd [#allocation4], %s586
      %s588 = sshll.u32 [#allocation5], 4
      %s589 = int_to_ptr.vmem [resolvable:$true] %s588
      %594 = dma.vmem_to_hbm [thread:$0]  %s589, 256, %s2, [#allocation4], 128, 128, 8
    $region17: #{tpu_custom_call.1} parent=1 // pred_fallthru
      _
    // Predicated region
    $region18: #{tpu_custom_call.1} parent=1 // pred_check
      _
    $region19: #{tpu_custom_call.1} parent=1 // pred_check_branch
      %596 = sbr.rel (0) target = $region21
    $region20: #{tpu_custom_call.1} parent=1 // pred_region
      %597 = dma.done [#allocation4], 256
    $region21: #{tpu_custom_call.1} parent=1 // pred_fallthru
      _
    %598 = vsyncpa [#allocation3], 1
    %599 = vsyncpa [#allocation4], 1

// kernel: tpu_custom_call.1
$region0: #{tpu_custom_call.1}
  #allocation0 [shape = 'u32[]', space=smem, size = 0x4, offset = 0x4, fixed_abs, tag = 'smem constant byte address 0x4 - core index']
  #allocation1 [shape = 'u32[144,128]{1,0:T(1,128)}', space=vmem, size = 0x12000, scoped, tag = 'internal scratch']
  %s0 = inlined_call_operand.vmem [shape: s32[16,1], index: 0, kind: input, shape index: {}]
  %s1 = inlined_call_operand.hbm [shape: f32[32,128], index: 1, kind: input, shape index: {}]
  %s2 = inlined_call_operand.hbm [shape: f32[16,128], index: 2, kind: output, shape index: {}]
  %s3 = sld [smem:[#allocation0]]
  $region22: #{tpu_custom_call.1} parent=0
    _
  %s5 = ssub.s32 1, %s3
  %s6 = scalar_select 0, %s5, %s3
  $region1: #{tpu_custom_call.1} parent=0
    #allocation2 [shape = 'u8[16384]{0}', space=vmem, size = 0x4000, scoped, tag = 'input window, operand 1, single buffered']
    #allocation3 [shape = 's32[1]{0}', space=sflag, size = 0x4, scoped, tag = 'scoped memory for tpu_custom_call.1']
    #allocation4 [shape = 's32[1]{0}', space=sflag, size = 0x4, scoped, tag = 'scoped memory for tpu_custom_call.1']
    #allocation5 [shape = 'u8[8192]{0}', space=vmem, size = 0x2000, scoped, tag = 'output window, operand 0, single buffered']
    %7 = vsyncpa [#allocation3], 0
    %8 = vsyncpa [#allocation4], 0
    // Predicated region
    $region2: #{tpu_custom_call.1} parent=1 // pred_check
      _
    $region3: #{tpu_custom_call.1} parent=1 // pred_check_branch
      %10 = sbr.rel (0) target = $region5
    $region4: #{tpu_custom_call.1} parent=1 // pred_region
      _
    $region5: #{tpu_custom_call.1} parent=1 // pred_fallthru
      _
    // Predicated region
    $region6: #{tpu_custom_call.1} parent=1 // pred_check
      _
    $region7: #{tpu_custom_call.1} parent=1 // pred_check_branch
      %12 = sbr.rel (0) target = $region9
    $region8: #{tpu_custom_call.1} parent=1 // pred_region
      %s14 = ssub.s32 512, 512
      %15 = vsyncadd [#allocation3], %s14
      %s16 = sshll.u32 [#allocation2], 4
      %s17 = int_to_ptr.vmem [resolvable:$true] %s16
      %22 = dma.hbm_to_vmem [thread:$0]  %s1, 512, %s17, [#allocation3], 128, 128, 8
    $region9: #{tpu_custom_call.1} parent=1 // pred_fallthru
      _
    // Predicated region
    $region10: #{tpu_custom_call.1} parent=1 // pred_check
      _
    $region11: #{tpu_custom_call.1} parent=1 // pred_check_branch
      %24 = sbr.rel (0) target = $region13
    $region12: #{tpu_custom_call.1} parent=1 // pred_region
      %25 = dma.done [#allocation3], 512
    $region13: #{tpu_custom_call.1} parent=1 // pred_fallthru
      _
    %v26 = vld [vmem:[%s0] sm:$0xff]
    %v27 = vld [vmem:[%s0 + $0x8] sm:$0xff]
    %v28 = vlaneseq
    %v29 = vand.u32 %v28, 127
    %30 = vset.pattern.permute.xlu0 0
    %31 = vperm.xlu0 %30, %v26
    %v32 = vpop.permute.xlu0 %31
    %33 = vset.pattern.permute.xlu0 0
    %34 = vperm.xlu0 %33, %v27
    %v35 = vpop.permute.xlu0 %34
    %vm36 = vcmp.eq.s32.totalorder %v29, %v32
    %vm37 = vcmp.eq.s32.totalorder %v29, %v35
    %v38 = vsel %vm36, 1, 0
    %v39 = vsel %vm37, 1, 0
    %v40 = vcvt.s32.f32 %v38
    %v41 = vcvt.s32.f32 %v39
    %v42 = vld [vmem:[#allocation2] sm:$0xff]
    %v43 = vld [vmem:[#allocation2 + $0x8] sm:$0xff]
    %v44 = vld [vmem:[#allocation2 + $0x10] sm:$0xff]
    %v45 = vld [vmem:[#allocation2 + $0x18] sm:$0xff]
    %vm46 = vcmask 261120
    %v48 = vsel %vm46, %v40, 0
    %v51 = vsel %vm46, %v41, 0
    %53 = vmatprep.subr.mxu0 0.0
    %54 = vmatpush1.msra.mxu0 0.0
    %55 = vmatprep.subr.mxu0 0.0
    %56 = vmatpush1.msra.mxu0 0.0
    %57 = vmatprep.subr.mxu0 0.0
    %58 = vmatpush1.msra.mxu0 0.0
    %59 = vmatprep.subr.mxu0 0.0
    %60 = vmatpush1.msra.mxu0 0.0
    %61 = vmatprep.subr.mxu0 0.0
    %62 = vmatpush1.msra.mxu0 0.0
    %63 = vmatprep.subr.mxu0 0.0
    %64 = vmatpush1.msra.mxu0 0.0
    %65 = vmatprep.subr.mxu0 0.0
    %66 = vmatpush1.msra.mxu0 0.0
    %67 = vmatprep.subr.mxu0 0.0
    %68 = vmatpush1.msra.mxu0 0.0
    %69 = vmatprep.subr.mxu0 0.0
    %70 = vmatpush1.msra.mxu0 0.0
    %71 = vmatprep.subr.mxu0 0.0
    %72 = vmatpush1.msra.mxu0 0.0
    %73 = vmatprep.subr.mxu0 0.0
    %74 = vmatpush1.msra.mxu0 0.0
    %75 = vmatprep.subr.mxu0 0.0
    %76 = vmatpush1.msra.mxu0 0.0
    %77 = vmatprep.subr.mxu0 0.0
    %78 = vmatpush1.msra.mxu0 %v45
    %79 = vmatprep.subr.mxu0 0.0
    %80 = vmatpush1.msra.mxu0 %v44
    %81 = vmatprep.subr.mxu0 0.0
    %82 = vmatpush1.msra.mxu0 %v43
    %83 = vmatprep.subr.mxu0 0.0
    %84 = vmatpush1.msra.mxu0 %v42
    %85 = vmatprep.subr.mxu0 0.0
    %86 = vmatpush2.msra.mxu0 0.0
    %87 = vmatprep.subr.mxu0 0.0
    %88 = vmatpush2.msra.mxu0 0.0
    %89 = vmatprep.subr.mxu0 0.0
    %90 = vmatpush2.msra.mxu0 0.0
    %91 = vmatprep.subr.mxu0 0.0
    %92 = vmatpush2.msra.mxu0 0.0
    %93 = vmatprep.subr.mxu0 0.0
    %94 = vmatpush2.msra.mxu0 0.0
    %95 = vmatprep.subr.mxu0 0.0
    %96 = vmatpush2.msra.mxu0 0.0
    %97 = vmatprep.subr.mxu0 0.0
    %98 = vmatpush2.msra.mxu0 0.0
    %99 = vmatprep.subr.mxu0 0.0
    %100 = vmatpush2.msra.mxu0 0.0
    %101 = vmatprep.subr.mxu0 0.0
    %102 = vmatpush2.msra.mxu0 0.0
    %103 = vmatprep.subr.mxu0 0.0
    %104 = vmatpush2.msra.mxu0 0.0
    %105 = vmatprep.subr.mxu0 0.0
    %106 = vmatpush2.msra.mxu0 0.0
    %107 = vmatprep.subr.mxu0 0.0
    %108 = vmatpush2.msra.mxu0 0.0
    %109 = vmatprep.subr.mxu0 0.0
    %110 = vmatpush2.msra.mxu0 0.0
    %111 = vmatprep.subr.mxu0 0.0
    %112 = vmatpush2.msra.mxu0 0.0
    %113 = vmatprep.subr.mxu0 0.0
    %114 = vmatpush2.msra.mxu0 0.0
    %115 = vmatprep.subr.mxu0 0.0
    %116 = vmatpush2.msra.mxu0 0.0
    %117 = vmatprep.mubr.f32.mxu0 0.0
    %118 = vmatmul.mubr.f32.gmra.mxu0 %v48
    %v119 = vpop.f32.mrf.mxu0
    %v120 = vadd.f32 0.0, %v119
    %v121 = vpop.f32.mrf.mxu0
    %122 = vmatprep.mubr.f32.mxu0 0.0
    %123 = vmatmul.mubr.f32.gmra.mxu0 %v51
    %v124 = vpop.f32.mrf.mxu0
    %v125 = vadd.f32 0.0, %v124
    %v126 = vpop.f32.mrf.mxu0
    %127 = vdwg.mxu0
    %128 = vst [vmem:[#allocation5] sm:$0xff] %v120
    %129 = vst [vmem:[#allocation5 + $0x8] sm:$0xff] %v125
    // Predicated region
    $region14: #{tpu_custom_call.1} parent=1 // pred_check
      _
    $region15: #{tpu_custom_call.1} parent=1 // pred_check_branch
      %131 = sbr.rel (0) target = $region17
    $region16: #{tpu_custom_call.1} parent=1 // pred_region
      %s133 = ssub.s32 256, 256
      %134 = vsyncadd [#allocation4], %s133
      %s135 = sshll.u32 [#allocation5], 4
      %s136 = int_to_ptr.vmem [resolvable:$true] %s135
      %141 = dma.vmem_to_hbm [thread:$0]  %s136, 256, %s2, [#allocation4], 128, 128, 8
    $region17: #{tpu_custom_call.1} parent=1 // pred_fallthru
      _
    // Predicated region
    $region18: #{tpu_custom_call.1} parent=1 // pred_check
      _
    $region19: #{tpu_custom_call.1} parent=1 // pred_check_branch
      %143 = sbr.rel (0) target = $region21
    $region20: #{tpu_custom_call.1} parent=1 // pred_region
      %144 = dma.done [#allocation4], 256
    $region21: #{tpu_custom_call.1} parent=1 // pred_fallthru
      _
    %145 = vsyncpa [#allocation3], 1
    %146 = vsyncpa [#allocation4], 1

// kernel: tpu_custom_call.1
$region0: #{tpu_custom_call.1}
  #allocation0 [shape = 'u32[]', space=smem, size = 0x4, offset = 0x4, fixed_abs, tag = 'smem constant byte address 0x4 - core index']
  #allocation1 [shape = 'u32[144,128]{1,0:T(1,128)}', space=vmem, size = 0x12000, scoped, tag = 'internal scratch']
  %s0 = inlined_call_operand.vmem [shape: s32[16,1], index: 0, kind: input, shape index: {}]
  %s1 = inlined_call_operand.hbm [shape: f32[32,128], index: 1, kind: input, shape index: {}]
  %s2 = inlined_call_operand.hbm [shape: f32[16,128], index: 2, kind: output, shape index: {}]
  %s3 = sld [smem:[#allocation0]]
  $region22: #{tpu_custom_call.1} parent=0
    _
  %s5 = ssub.s32 1, %s3
  %s6 = scalar_select 0, %s5, %s3
  $region1: #{tpu_custom_call.1} parent=0
    #allocation2 [shape = 'u8[16384]{0}', space=vmem, size = 0x4000, scoped, tag = 'input window, operand 1, single buffered']
    #allocation3 [shape = 's32[1]{0}', space=sflag, size = 0x4, scoped, tag = 'scoped memory for tpu_custom_call.1']
    #allocation4 [shape = 's32[1]{0}', space=sflag, size = 0x4, scoped, tag = 'scoped memory for tpu_custom_call.1']
    #allocation5 [shape = 'u8[8192]{0}', space=vmem, size = 0x2000, scoped, tag = 'output window, operand 0, single buffered']
    %7 = vsyncpa [#allocation3], 0
    %8 = vsyncpa [#allocation4], 0
    // Predicated region
    $region2: #{tpu_custom_call.1} parent=1 // pred_check
      _
    $region3: #{tpu_custom_call.1} parent=1 // pred_check_branch
      %10 = sbr.rel (0) target = $region5
    $region4: #{tpu_custom_call.1} parent=1 // pred_region
      _
    $region5: #{tpu_custom_call.1} parent=1 // pred_fallthru
      _
    // Predicated region
    $region6: #{tpu_custom_call.1} parent=1 // pred_check
      _
    $region7: #{tpu_custom_call.1} parent=1 // pred_check_branch
      %12 = sbr.rel (0) target = $region9
    $region8: #{tpu_custom_call.1} parent=1 // pred_region
      %s14 = ssub.s32 512, 512
      %15 = vsyncadd [#allocation3], %s14
      %s16 = sshll.u32 [#allocation2], 4
      %s17 = int_to_ptr.vmem [resolvable:$true] %s16
      %22 = dma.hbm_to_vmem [thread:$0]  %s1, 512, %s17, [#allocation3], 128, 128, 8
    $region9: #{tpu_custom_call.1} parent=1 // pred_fallthru
      _
    // Predicated region
    $region10: #{tpu_custom_call.1} parent=1 // pred_check
      _
    $region11: #{tpu_custom_call.1} parent=1 // pred_check_branch
      %24 = sbr.rel (0) target = $region13
    $region12: #{tpu_custom_call.1} parent=1 // pred_region
      %25 = dma.done [#allocation3], 512
    $region13: #{tpu_custom_call.1} parent=1 // pred_fallthru
      _
    %v26 = vld [vmem:[%s0] sm:$0xff]
    %v27 = vld [vmem:[%s0 + $0x8] sm:$0xff]
    %v28 = vlaneseq
    %v29 = vand.u32 %v28, 127
    %30 = vset.pattern.permute.xlu0 0
    %31 = vperm.xlu0 %30, %v26
    %v32 = vpop.permute.xlu0 %31
    %33 = vset.pattern.permute.xlu0 0
    %34 = vperm.xlu0 %33, %v27
    %v35 = vpop.permute.xlu0 %34
    %vm36 = vcmp.eq.s32.totalorder %v29, %v32
    %vm37 = vcmp.eq.s32.totalorder %v29, %v35
    %v38 = vsel %vm36, 1, 0
    %v39 = vsel %vm37, 1, 0
    %v40 = vcvt.s32.f32 %v38
    %v41 = vcvt.s32.f32 %v39
    %v42 = vld [vmem:[#allocation2] sm:$0xff]
    %v43 = vld [vmem:[#allocation2 + $0x8] sm:$0xff]
    %v44 = vld [vmem:[#allocation2 + $0x10] sm:$0xff]
    %v45 = vld [vmem:[#allocation2 + $0x18] sm:$0xff]
    %vm46 = vcmask 261120
    %v48 = vsel %vm46, %v40, 0
    %v51 = vsel %vm46, %v41, 0
    %53 = vmatprep.subr.mxu0 0.0
    %54 = vmatpush1.msra.mxu0 0.0
    %55 = vmatprep.subr.mxu0 0.0
    %56 = vmatpush1.msra.mxu0 0.0
    %57 = vmatprep.subr.mxu0 0.0
    %58 = vmatpush1.msra.mxu0 0.0
    %59 = vmatprep.subr.mxu0 0.0
    %60 = vmatpush1.msra.mxu0 0.0
    %61 = vmatprep.subr.mxu0 0.0
    %62 = vmatpush1.msra.mxu0 0.0
    %63 = vmatprep.subr.mxu0 0.0
    %64 = vmatpush1.msra.mxu0 0.0
    %65 = vmatprep.subr.mxu0 0.0
    %66 = vmatpush1.msra.mxu0 0.0
    %67 = vmatprep.subr.mxu0 0.0
    %68 = vmatpush1.msra.mxu0 0.0
    %69 = vmatprep.subr.mxu0 0.0
    %70 = vmatpush1.msra.mxu0 0.0
    %71 = vmatprep.subr.mxu0 0.0
    %72 = vmatpush1.msra.mxu0 0.0
    %73 = vmatprep.subr.mxu0 0.0
    %74 = vmatpush1.msra.mxu0 0.0
    %75 = vmatprep.subr.mxu0 0.0
    %76 = vmatpush1.msra.mxu0 0.0
    %77 = vmatprep.subr.mxu0 0.0
    %v78 = vand.u32 %v45, 4294901760
    %79 = vmatpush1.msra.mxu0 %v78
    %80 = vmatprep.subr.mxu0 0.0
    %v81 = vand.u32 %v44, 4294901760
    %82 = vmatpush1.msra.mxu0 %v81
    %83 = vmatprep.subr.mxu0 0.0
    %v84 = vand.u32 %v43, 4294901760
    %85 = vmatpush1.msra.mxu0 %v84
    %86 = vmatprep.subr.mxu0 0.0
    %v87 = vand.u32 %v42, 4294901760
    %88 = vmatpush1.msra.mxu0 %v87
    %89 = vmatprep.subr.mxu0 0.0
    %90 = vmatpush2.msra.mxu0 0.0
    %91 = vmatprep.subr.mxu0 0.0
    %92 = vmatpush2.msra.mxu0 0.0
    %93 = vmatprep.subr.mxu0 0.0
    %94 = vmatpush2.msra.mxu0 0.0
    %95 = vmatprep.subr.mxu0 0.0
    %96 = vmatpush2.msra.mxu0 0.0
    %97 = vmatprep.subr.mxu0 0.0
    %98 = vmatpush2.msra.mxu0 0.0
    %99 = vmatprep.subr.mxu0 0.0
    %100 = vmatpush2.msra.mxu0 0.0
    %101 = vmatprep.subr.mxu0 0.0
    %102 = vmatpush2.msra.mxu0 0.0
    %103 = vmatprep.subr.mxu0 0.0
    %104 = vmatpush2.msra.mxu0 0.0
    %105 = vmatprep.subr.mxu0 0.0
    %106 = vmatpush2.msra.mxu0 0.0
    %107 = vmatprep.subr.mxu0 0.0
    %108 = vmatpush2.msra.mxu0 0.0
    %109 = vmatprep.subr.mxu0 0.0
    %110 = vmatpush2.msra.mxu0 0.0
    %111 = vmatprep.subr.mxu0 0.0
    %112 = vmatpush2.msra.mxu0 0.0
    %113 = vmatprep.subr.mxu0 0.0
    %114 = vmatpush2.msra.mxu0 0.0
    %115 = vmatprep.subr.mxu0 0.0
    %116 = vmatpush2.msra.mxu0 0.0
    %117 = vmatprep.subr.mxu0 0.0
    %118 = vmatpush2.msra.mxu0 0.0
    %119 = vmatprep.subr.mxu0 0.0
    %120 = vmatpush2.msra.mxu0 0.0
    %121 = vmatprep.mubr.f32.mxu0 0.0
    %v122 = vand.u32 %v48, 4294901760
    %v123 = vsub.f32 %v48, %v122
    %v124 = vand.u32 %v123, 4294901760
    %v125 = vsub.f32 %v123, %v124
    %v126 = vand.u32 %v125, 4294901760
    %127 = vmatmul.mubr.f32.gmra.mxu0 %v126
    %v128 = vpop.f32.mrf.mxu0
    %v129 = vadd.f32 0.0, %v128
    %v130 = vpop.f32.mrf.mxu0
    %131 = vmatprep.mubr.f32.mxu0 0.0
    %v132 = vand.u32 %v51, 4294901760
    %v133 = vsub.f32 %v51, %v132
    %v134 = vand.u32 %v133, 4294901760
    %v135 = vsub.f32 %v133, %v134
    %v136 = vand.u32 %v135, 4294901760
    %137 = vmatmul.mubr.f32.gmra.mxu0 %v136
    %v138 = vpop.f32.mrf.mxu0
    %v139 = vadd.f32 0.0, %v138
    %v140 = vpop.f32.mrf.mxu0
    %141 = vdwg.mxu0
    %142 = vmatprep.subr.mxu0 0.0
    %143 = vmatpush1.msra.mxu0 0.0
    %144 = vmatprep.subr.mxu0 0.0
    %145 = vmatpush1.msra.mxu0 0.0
    %146 = vmatprep.subr.mxu0 0.0
    %147 = vmatpush1.msra.mxu0 0.0
    %148 = vmatprep.subr.mxu0 0.0
    %149 = vmatpush1.msra.mxu0 0.0
    %150 = vmatprep.subr.mxu0 0.0
    %151 = vmatpush1.msra.mxu0 0.0
    %152 = vmatprep.subr.mxu0 0.0
    %153 = vmatpush1.msra.mxu0 0.0
    %154 = vmatprep.subr.mxu0 0.0
    %155 = vmatpush1.msra.mxu0 0.0
    %156 = vmatprep.subr.mxu0 0.0
    %157 = vmatpush1.msra.mxu0 0.0
    %158 = vmatprep.subr.mxu0 0.0
    %159 = vmatpush1.msra.mxu0 0.0
    %160 = vmatprep.subr.mxu0 0.0
    %161 = vmatpush1.msra.mxu0 0.0
    %162 = vmatprep.subr.mxu0 0.0
    %163 = vmatpush1.msra.mxu0 0.0
    %164 = vmatprep.subr.mxu0 0.0
    %165 = vmatpush1.msra.mxu0 0.0
    %166 = vmatprep.subr.mxu0 0.0
    %v167 = vand.u32 %v45, 4294901760
    %v168 = vsub.f32 %v45, %v167
    %v169 = vand.u32 %v168, 4294901760
    %v170 = vsub.f32 %v168, %v169
    %v171 = vand.u32 %v170, 4294901760
    %172 = vmatpush1.msra.mxu0 %v171
    %173 = vmatprep.subr.mxu0 0.0
    %v174 = vand.u32 %v44, 4294901760
    %v175 = vsub.f32 %v44, %v174
    %v176 = vand.u32 %v175, 4294901760
    %v177 = vsub.f32 %v175, %v176
    %v178 = vand.u32 %v177, 4294901760
    %179 = vmatpush1.msra.mxu0 %v178
    %180 = vmatprep.subr.mxu0 0.0
    %v181 = vand.u32 %v43, 4294901760
    %v182 = vsub.f32 %v43, %v181
    %v183 = vand.u32 %v182, 4294901760
    %v184 = vsub.f32 %v182, %v183
    %v185 = vand.u32 %v184, 4294901760
    %186 = vmatpush1.msra.mxu0 %v185
    %187 = vmatprep.subr.mxu0 0.0
    %v188 = vand.u32 %v42, 4294901760
    %v189 = vsub.f32 %v42, %v188
    %v190 = vand.u32 %v189, 4294901760
    %v191 = vsub.f32 %v189, %v190
    %v192 = vand.u32 %v191, 4294901760
    %193 = vmatpush1.msra.mxu0 %v192
    %194 = vmatprep.subr.mxu0 0.0
    %195 = vmatpush2.msra.mxu0 0.0
    %196 = vmatprep.subr.mxu0 0.0
    %197 = vmatpush2.msra.mxu0 0.0
    %198 = vmatprep.subr.mxu0 0.0
    %199 = vmatpush2.msra.mxu0 0.0
    %200 = vmatprep.subr.mxu0 0.0
    %201 = vmatpush2.msra.mxu0 0.0
    %202 = vmatprep.subr.mxu0 0.0
    %203 = vmatpush2.msra.mxu0 0.0
    %204 = vmatprep.subr.mxu0 0.0
    %205 = vmatpush2.msra.mxu0 0.0
    %206 = vmatprep.subr.mxu0 0.0
    %207 = vmatpush2.msra.mxu0 0.0
    %208 = vmatprep.subr.mxu0 0.0
    %209 = vmatpush2.msra.mxu0 0.0
    %210 = vmatprep.subr.mxu0 0.0
    %211 = vmatpush2.msra.mxu0 0.0
    %212 = vmatprep.subr.mxu0 0.0
    %213 = vmatpush2.msra.mxu0 0.0
    %214 = vmatprep.subr.mxu0 0.0
    %215 = vmatpush2.msra.mxu0 0.0
    %216 = vmatprep.subr.mxu0 0.0
    %217 = vmatpush2.msra.mxu0 0.0
    %218 = vmatprep.subr.mxu0 0.0
    %219 = vmatpush2.msra.mxu0 0.0
    %220 = vmatprep.subr.mxu0 0.0
    %221 = vmatpush2.msra.mxu0 0.0
    %222 = vmatprep.subr.mxu0 0.0
    %223 = vmatpush2.msra.mxu0 0.0
    %224 = vmatprep.subr.mxu0 0.0
    %225 = vmatpush2.msra.mxu0 0.0
    %226 = vmatprep.mubr.f32.mxu0 0.0
    %v227 = vand.u32 %v48, 4294901760
    %228 = vmatmul.mubr.f32.gmra.mxu0 %v227
    %v229 = vpop.f32.mrf.mxu0
    %v230 = vadd.f32 %v129, %v229
    %v231 = vpop.f32.mrf.mxu0
    %232 = vmatprep.mubr.f32.mxu0 0.0
    %v233 = vand.u32 %v51, 4294901760
    %234 = vmatmul.mubr.f32.gmra.mxu0 %v233
    %v235 = vpop.f32.mrf.mxu0
    %v236 = vadd.f32 %v139, %v235
    %v237 = vpop.f32.mrf.mxu0
    %238 = vdwg.mxu0
    %239 = vmatprep.subr.mxu0 0.0
    %240 = vmatpush1.msra.mxu0 0.0
    %241 = vmatprep.subr.mxu0 0.0
    %242 = vmatpush1.msra.mxu0 0.0
    %243 = vmatprep.subr.mxu0 0.0
    %244 = vmatpush1.msra.mxu0 0.0
    %245 = vmatprep.subr.mxu0 0.0
    %246 = vmatpush1.msra.mxu0 0.0
    %247 = vmatprep.subr.mxu0 0.0
    %248 = vmatpush1.msra.mxu0 0.0
    %249 = vmatprep.subr.mxu0 0.0
    %250 = vmatpush1.msra.mxu0 0.0
    %251 = vmatprep.subr.mxu0 0.0
    %252 = vmatpush1.msra.mxu0 0.0
    %253 = vmatprep.subr.mxu0 0.0
    %254 = vmatpush1.msra.mxu0 0.0
    %255 = vmatprep.subr.mxu0 0.0
    %256 = vmatpush1.msra.mxu0 0.0
    %257 = vmatprep.subr.mxu0 0.0
    %258 = vmatpush1.msra.mxu0 0.0
    %259 = vmatprep.subr.mxu0 0.0
    %260 = vmatpush1.msra.mxu0 0.0
    %261 = vmatprep.subr.mxu0 0.0
    %262 = vmatpush1.msra.mxu0 0.0
    %263 = vmatprep.subr.mxu0 0.0
    %v264 = vand.u32 %v45, 4294901760
    %v265 = vsub.f32 %v45, %v264
    %266 = vmatpush1.msra.mxu0 %v265
    %267 = vmatprep.subr.mxu0 0.0
    %v268 = vand.u32 %v44, 4294901760
    %v269 = vsub.f32 %v44, %v268
    %270 = vmatpush1.msra.mxu0 %v269
    %271 = vmatprep.subr.mxu0 0.0
    %v272 = vand.u32 %v43, 4294901760
    %v273 = vsub.f32 %v43, %v272
    %274 = vmatpush1.msra.mxu0 %v273
    %275 = vmatprep.subr.mxu0 0.0
    %v276 = vand.u32 %v42, 4294901760
    %v277 = vsub.f32 %v42, %v276
    %278 = vmatpush1.msra.mxu0 %v277
    %279 = vmatprep.subr.mxu0 0.0
    %280 = vmatpush2.msra.mxu0 0.0
    %281 = vmatprep.subr.mxu0 0.0
    %282 = vmatpush2.msra.mxu0 0.0
    %283 = vmatprep.subr.mxu0 0.0
    %284 = vmatpush2.msra.mxu0 0.0
    %285 = vmatprep.subr.mxu0 0.0
    %286 = vmatpush2.msra.mxu0 0.0
    %287 = vmatprep.subr.mxu0 0.0
    %288 = vmatpush2.msra.mxu0 0.0
    %289 = vmatprep.subr.mxu0 0.0
    %290 = vmatpush2.msra.mxu0 0.0
    %291 = vmatprep.subr.mxu0 0.0
    %292 = vmatpush2.msra.mxu0 0.0
    %293 = vmatprep.subr.mxu0 0.0
    %294 = vmatpush2.msra.mxu0 0.0
    %295 = vmatprep.subr.mxu0 0.0
    %296 = vmatpush2.msra.mxu0 0.0
    %297 = vmatprep.subr.mxu0 0.0
    %298 = vmatpush2.msra.mxu0 0.0
    %299 = vmatprep.subr.mxu0 0.0
    %300 = vmatpush2.msra.mxu0 0.0
    %301 = vmatprep.subr.mxu0 0.0
    %302 = vmatpush2.msra.mxu0 0.0
    %303 = vmatprep.subr.mxu0 0.0
    %304 = vmatpush2.msra.mxu0 0.0
    %305 = vmatprep.subr.mxu0 0.0
    %306 = vmatpush2.msra.mxu0 0.0
    %307 = vmatprep.subr.mxu0 0.0
    %308 = vmatpush2.msra.mxu0 0.0
    %309 = vmatprep.subr.mxu0 0.0
    %310 = vmatpush2.msra.mxu0 0.0
    %311 = vmatprep.mubr.f32.mxu0 0.0
    %v312 = vand.u32 %v48, 4294901760
    %v313 = vsub.f32 %v48, %v312
    %314 = vmatmul.mubr.f32.gmra.mxu0 %v313
    %v315 = vpop.f32.mrf.mxu0
    %v316 = vadd.f32 %v230, %v315
    %v317 = vpop.f32.mrf.mxu0
    %318 = vmatprep.mubr.f32.mxu0 0.0
    %v319 = vand.u32 %v51, 4294901760
    %v320 = vsub.f32 %v51, %v319
    %321 = vmatmul.mubr.f32.gmra.mxu0 %v320
    %v322 = vpop.f32.mrf.mxu0
    %v323 = vadd.f32 %v236, %v322
    %v324 = vpop.f32.mrf.mxu0
    %325 = vdwg.mxu0
    %326 = vmatprep.subr.mxu0 0.0
    %327 = vmatpush1.msra.mxu0 0.0
    %328 = vmatprep.subr.mxu0 0.0
    %329 = vmatpush1.msra.mxu0 0.0
    %330 = vmatprep.subr.mxu0 0.0
    %331 = vmatpush1.msra.mxu0 0.0
    %332 = vmatprep.subr.mxu0 0.0
    %333 = vmatpush1.msra.mxu0 0.0
    %334 = vmatprep.subr.mxu0 0.0
    %335 = vmatpush1.msra.mxu0 0.0
    %336 = vmatprep.subr.mxu0 0.0
    %337 = vmatpush1.msra.mxu0 0.0
    %338 = vmatprep.subr.mxu0 0.0
    %339 = vmatpush1.msra.mxu0 0.0
    %340 = vmatprep.subr.mxu0 0.0
    %341 = vmatpush1.msra.mxu0 0.0
    %342 = vmatprep.subr.mxu0 0.0
    %343 = vmatpush1.msra.mxu0 0.0
    %344 = vmatprep.subr.mxu0 0.0
    %345 = vmatpush1.msra.mxu0 0.0
    %346 = vmatprep.subr.mxu0 0.0
    %347 = vmatpush1.msra.mxu0 0.0
    %348 = vmatprep.subr.mxu0 0.0
    %349 = vmatpush1.msra.mxu0 0.0
    %350 = vmatprep.subr.mxu0 0.0
    %v351 = vand.u32 %v45, 4294901760
    %352 = vmatpush1.msra.mxu0 %v351
    %353 = vmatprep.subr.mxu0 0.0
    %v354 = vand.u32 %v44, 4294901760
    %355 = vmatpush1.msra.mxu0 %v354
    %356 = vmatprep.subr.mxu0 0.0
    %v357 = vand.u32 %v43, 4294901760
    %358 = vmatpush1.msra.mxu0 %v357
    %359 = vmatprep.subr.mxu0 0.0
    %v360 = vand.u32 %v42, 4294901760
    %361 = vmatpush1.msra.mxu0 %v360
    %362 = vmatprep.subr.mxu0 0.0
    %363 = vmatpush2.msra.mxu0 0.0
    %364 = vmatprep.subr.mxu0 0.0
    %365 = vmatpush2.msra.mxu0 0.0
    %366 = vmatprep.subr.mxu0 0.0
    %367 = vmatpush2.msra.mxu0 0.0
    %368 = vmatprep.subr.mxu0 0.0
    %369 = vmatpush2.msra.mxu0 0.0
    %370 = vmatprep.subr.mxu0 0.0
    %371 = vmatpush2.msra.mxu0 0.0
    %372 = vmatprep.subr.mxu0 0.0
    %373 = vmatpush2.msra.mxu0 0.0
    %374 = vmatprep.subr.mxu0 0.0
    %375 = vmatpush2.msra.mxu0 0.0
    %376 = vmatprep.subr.mxu0 0.0
    %377 = vmatpush2.msra.mxu0 0.0
    %378 = vmatprep.subr.mxu0 0.0
    %379 = vmatpush2.msra.mxu0 0.0
    %380 = vmatprep.subr.mxu0 0.0
    %381 = vmatpush2.msra.mxu0 0.0
    %382 = vmatprep.subr.mxu0 0.0
    %383 = vmatpush2.msra.mxu0 0.0
    %384 = vmatprep.subr.mxu0 0.0
    %385 = vmatpush2.msra.mxu0 0.0
    %386 = vmatprep.subr.mxu0 0.0
    %387 = vmatpush2.msra.mxu0 0.0
    %388 = vmatprep.subr.mxu0 0.0
    %389 = vmatpush2.msra.mxu0 0.0
    %390 = vmatprep.subr.mxu0 0.0
    %391 = vmatpush2.msra.mxu0 0.0
    %392 = vmatprep.subr.mxu0 0.0
    %393 = vmatpush2.msra.mxu0 0.0
    %394 = vmatprep.mubr.f32.mxu0 0.0
    %v395 = vand.u32 %v48, 4294901760
    %v396 = vsub.f32 %v48, %v395
    %v397 = vand.u32 %v396, 4294901760
    %398 = vmatmul.mubr.f32.gmra.mxu0 %v397
    %v399 = vpop.f32.mrf.mxu0
    %v400 = vadd.f32 %v316, %v399
    %v401 = vpop.f32.mrf.mxu0
    %402 = vmatprep.mubr.f32.mxu0 0.0
    %v403 = vand.u32 %v51, 4294901760
    %v404 = vsub.f32 %v51, %v403
    %v405 = vand.u32 %v404, 4294901760
    %406 = vmatmul.mubr.f32.gmra.mxu0 %v405
    %v407 = vpop.f32.mrf.mxu0
    %v408 = vadd.f32 %v323, %v407
    %v409 = vpop.f32.mrf.mxu0
    %410 = vdwg.mxu0
    %411 = vmatprep.subr.mxu0 0.0
    %412 = vmatpush1.msra.mxu0 0.0
    %413 = vmatprep.subr.mxu0 0.0
    %414 = vmatpush1.msra.mxu0 0.0
    %415 = vmatprep.subr.mxu0 0.0
    %416 = vmatpush1.msra.mxu0 0.0
    %417 = vmatprep.subr.mxu0 0.0
    %418 = vmatpush1.msra.mxu0 0.0
    %419 = vmatprep.subr.mxu0 0.0
    %420 = vmatpush1.msra.mxu0 0.0
    %421 = vmatprep.subr.mxu0 0.0
    %422 = vmatpush1.msra.mxu0 0.0
    %423 = vmatprep.subr.mxu0 0.0
    %424 = vmatpush1.msra.mxu0 0.0
    %425 = vmatprep.subr.mxu0 0.0
    %426 = vmatpush1.msra.mxu0 0.0
    %427 = vmatprep.subr.mxu0 0.0
    %428 = vmatpush1.msra.mxu0 0.0
    %429 = vmatprep.subr.mxu0 0.0
    %430 = vmatpush1.msra.mxu0 0.0
    %431 = vmatprep.subr.mxu0 0.0
    %432 = vmatpush1.msra.mxu0 0.0
    %433 = vmatprep.subr.mxu0 0.0
    %434 = vmatpush1.msra.mxu0 0.0
    %435 = vmatprep.subr.mxu0 0.0
    %v436 = vand.u32 %v45, 4294901760
    %v437 = vsub.f32 %v45, %v436
    %v438 = vand.u32 %v437, 4294901760
    %439 = vmatpush1.msra.mxu0 %v438
    %440 = vmatprep.subr.mxu0 0.0
    %v441 = vand.u32 %v44, 4294901760
    %v442 = vsub.f32 %v44, %v441
    %v443 = vand.u32 %v442, 4294901760
    %444 = vmatpush1.msra.mxu0 %v443
    %445 = vmatprep.subr.mxu0 0.0
    %v446 = vand.u32 %v43, 4294901760
    %v447 = vsub.f32 %v43, %v446
    %v448 = vand.u32 %v447, 4294901760
    %449 = vmatpush1.msra.mxu0 %v448
    %450 = vmatprep.subr.mxu0 0.0
    %v451 = vand.u32 %v42, 4294901760
    %v452 = vsub.f32 %v42, %v451
    %v453 = vand.u32 %v452, 4294901760
    %454 = vmatpush1.msra.mxu0 %v453
    %455 = vmatprep.subr.mxu0 0.0
    %456 = vmatpush2.msra.mxu0 0.0
    %457 = vmatprep.subr.mxu0 0.0
    %458 = vmatpush2.msra.mxu0 0.0
    %459 = vmatprep.subr.mxu0 0.0
    %460 = vmatpush2.msra.mxu0 0.0
    %461 = vmatprep.subr.mxu0 0.0
    %462 = vmatpush2.msra.mxu0 0.0
    %463 = vmatprep.subr.mxu0 0.0
    %464 = vmatpush2.msra.mxu0 0.0
    %465 = vmatprep.subr.mxu0 0.0
    %466 = vmatpush2.msra.mxu0 0.0
    %467 = vmatprep.subr.mxu0 0.0
    %468 = vmatpush2.msra.mxu0 0.0
    %469 = vmatprep.subr.mxu0 0.0
    %470 = vmatpush2.msra.mxu0 0.0
    %471 = vmatprep.subr.mxu0 0.0
    %472 = vmatpush2.msra.mxu0 0.0
    %473 = vmatprep.subr.mxu0 0.0
    %474 = vmatpush2.msra.mxu0 0.0
    %475 = vmatprep.subr.mxu0 0.0
    %476 = vmatpush2.msra.mxu0 0.0
    %477 = vmatprep.subr.mxu0 0.0
    %478 = vmatpush2.msra.mxu0 0.0
    %479 = vmatprep.subr.mxu0 0.0
    %480 = vmatpush2.msra.mxu0 0.0
    %481 = vmatprep.subr.mxu0 0.0
    %482 = vmatpush2.msra.mxu0 0.0
    %483 = vmatprep.subr.mxu0 0.0
    %484 = vmatpush2.msra.mxu0 0.0
    %485 = vmatprep.subr.mxu0 0.0
    %486 = vmatpush2.msra.mxu0 0.0
    %487 = vmatprep.mubr.f32.mxu0 0.0
    %v488 = vand.u32 %v48, 4294901760
    %489 = vmatmul.mubr.f32.gmra.mxu0 %v488
    %v490 = vpop.f32.mrf.mxu0
    %v491 = vadd.f32 %v400, %v490
    %v492 = vpop.f32.mrf.mxu0
    %493 = vmatprep.mubr.f32.mxu0 0.0
    %v494 = vand.u32 %v51, 4294901760
    %495 = vmatmul.mubr.f32.gmra.mxu0 %v494
    %v496 = vpop.f32.mrf.mxu0
    %v497 = vadd.f32 %v408, %v496
    %v498 = vpop.f32.mrf.mxu0
    %499 = vdwg.mxu0
    %500 = vmatprep.subr.mxu0 0.0
    %501 = vmatpush1.msra.mxu0 0.0
    %502 = vmatprep.subr.mxu0 0.0
    %503 = vmatpush1.msra.mxu0 0.0
    %504 = vmatprep.subr.mxu0 0.0
    %505 = vmatpush1.msra.mxu0 0.0
    %506 = vmatprep.subr.mxu0 0.0
    %507 = vmatpush1.msra.mxu0 0.0
    %508 = vmatprep.subr.mxu0 0.0
    %509 = vmatpush1.msra.mxu0 0.0
    %510 = vmatprep.subr.mxu0 0.0
    %511 = vmatpush1.msra.mxu0 0.0
    %512 = vmatprep.subr.mxu0 0.0
    %513 = vmatpush1.msra.mxu0 0.0
    %514 = vmatprep.subr.mxu0 0.0
    %515 = vmatpush1.msra.mxu0 0.0
    %516 = vmatprep.subr.mxu0 0.0
    %517 = vmatpush1.msra.mxu0 0.0
    %518 = vmatprep.subr.mxu0 0.0
    %519 = vmatpush1.msra.mxu0 0.0
    %520 = vmatprep.subr.mxu0 0.0
    %521 = vmatpush1.msra.mxu0 0.0
    %522 = vmatprep.subr.mxu0 0.0
    %523 = vmatpush1.msra.mxu0 0.0
    %524 = vmatprep.subr.mxu0 0.0
    %v525 = vand.u32 %v45, 4294901760
    %526 = vmatpush1.msra.mxu0 %v525
    %527 = vmatprep.subr.mxu0 0.0
    %v528 = vand.u32 %v44, 4294901760
    %529 = vmatpush1.msra.mxu0 %v528
    %530 = vmatprep.subr.mxu0 0.0
    %v531 = vand.u32 %v43, 4294901760
    %532 = vmatpush1.msra.mxu0 %v531
    %533 = vmatprep.subr.mxu0 0.0
    %v534 = vand.u32 %v42, 4294901760
    %535 = vmatpush1.msra.mxu0 %v534
    %536 = vmatprep.subr.mxu0 0.0
    %537 = vmatpush2.msra.mxu0 0.0
    %538 = vmatprep.subr.mxu0 0.0
    %539 = vmatpush2.msra.mxu0 0.0
    %540 = vmatprep.subr.mxu0 0.0
    %541 = vmatpush2.msra.mxu0 0.0
    %542 = vmatprep.subr.mxu0 0.0
    %543 = vmatpush2.msra.mxu0 0.0
    %544 = vmatprep.subr.mxu0 0.0
    %545 = vmatpush2.msra.mxu0 0.0
    %546 = vmatprep.subr.mxu0 0.0
    %547 = vmatpush2.msra.mxu0 0.0
    %548 = vmatprep.subr.mxu0 0.0
    %549 = vmatpush2.msra.mxu0 0.0
    %550 = vmatprep.subr.mxu0 0.0
    %551 = vmatpush2.msra.mxu0 0.0
    %552 = vmatprep.subr.mxu0 0.0
    %553 = vmatpush2.msra.mxu0 0.0
    %554 = vmatprep.subr.mxu0 0.0
    %555 = vmatpush2.msra.mxu0 0.0
    %556 = vmatprep.subr.mxu0 0.0
    %557 = vmatpush2.msra.mxu0 0.0
    %558 = vmatprep.subr.mxu0 0.0
    %559 = vmatpush2.msra.mxu0 0.0
    %560 = vmatprep.subr.mxu0 0.0
    %561 = vmatpush2.msra.mxu0 0.0
    %562 = vmatprep.subr.mxu0 0.0
    %563 = vmatpush2.msra.mxu0 0.0
    %564 = vmatprep.subr.mxu0 0.0
    %565 = vmatpush2.msra.mxu0 0.0
    %566 = vmatprep.subr.mxu0 0.0
    %567 = vmatpush2.msra.mxu0 0.0
    %568 = vmatprep.mubr.f32.mxu0 0.0
    %v569 = vand.u32 %v48, 4294901760
    %570 = vmatmul.mubr.f32.gmra.mxu0 %v569
    %v571 = vpop.f32.mrf.mxu0
    %v572 = vadd.f32 %v491, %v571
    %v573 = vpop.f32.mrf.mxu0
    %574 = vmatprep.mubr.f32.mxu0 0.0
    %v575 = vand.u32 %v51, 4294901760
    %576 = vmatmul.mubr.f32.gmra.mxu0 %v575
    %v577 = vpop.f32.mrf.mxu0
    %v578 = vadd.f32 %v497, %v577
    %v579 = vpop.f32.mrf.mxu0
    %580 = vdwg.mxu0
    %581 = vst [vmem:[#allocation5] sm:$0xff] %v572
    %582 = vst [vmem:[#allocation5 + $0x8] sm:$0xff] %v578
    // Predicated region
    $region14: #{tpu_custom_call.1} parent=1 // pred_check
      _
    $region15: #{tpu_custom_call.1} parent=1 // pred_check_branch
      %584 = sbr.rel (0) target = $region17
    $region16: #{tpu_custom_call.1} parent=1 // pred_region
      %s586 = ssub.s32 256, 256
      %587 = vsyncadd [#allocation4], %s586
      %s588 = sshll.u32 [#allocation5], 4
      %s589 = int_to_ptr.vmem [resolvable:$true] %s588
      %594 = dma.vmem_to_hbm [thread:$0]  %s589, 256, %s2, [#allocation4], 128, 128, 8
    $region17: #{tpu_custom_call.1} parent=1 // pred_fallthru
      _
    // Predicated region
    $region18: #{tpu_custom_call.1} parent=1 // pred_check
      _
    $region19: #{tpu_custom_call.1} parent=1 // pred_check_branch
      %596 = sbr.rel (0) target = $region21
    $region20: #{tpu_custom_call.1} parent=1 // pred_region
      %597 = dma.done [#allocation4], 256
    $region21: #{tpu_custom_call.1} parent=1 // pred_fallthru
      _
    %598 = vsyncpa [#allocation3], 1
    %599 = vsyncpa [#allocation4], 1

// kernel: tpu_custom_call.1
$region0: #{tpu_custom_call.1}
  #allocation0 [shape = 'u32[]', space=smem, size = 0x4, offset = 0x4, fixed_abs, tag = 'smem constant byte address 0x4 - core index']
  #allocation1 [shape = 'u32[144,128]{1,0:T(1,128)}', space=vmem, size = 0x12000, scoped, tag = 'internal scratch']
  %s0 = inlined_call_operand.vmem [shape: s32[16,1], index: 0, kind: input, shape index: {}]
  %s1 = inlined_call_operand.hbm [shape: f32[32,128], index: 1, kind: input, shape index: {}]
  %s2 = inlined_call_operand.hbm [shape: f32[16,128], index: 2, kind: output, shape index: {}]
  %s3 = sld [smem:[#allocation0]]
  $region22: #{tpu_custom_call.1} parent=0
    _
  %s5 = ssub.s32 1, %s3
  %s6 = scalar_select 0, %s5, %s3
  $region1: #{tpu_custom_call.1} parent=0
    #allocation2 [shape = 'u8[16384]{0}', space=vmem, size = 0x4000, scoped, tag = 'input window, operand 1, single buffered']
    #allocation3 [shape = 's32[1]{0}', space=sflag, size = 0x4, scoped, tag = 'scoped memory for tpu_custom_call.1']
    #allocation4 [shape = 's32[1]{0}', space=sflag, size = 0x4, scoped, tag = 'scoped memory for tpu_custom_call.1']
    #allocation5 [shape = 'u8[8192]{0}', space=vmem, size = 0x2000, scoped, tag = 'output window, operand 0, single buffered']
    %7 = vsyncpa [#allocation3], 0
    %8 = vsyncpa [#allocation4], 0
    // Predicated region
    $region2: #{tpu_custom_call.1} parent=1 // pred_check
      _
    $region3: #{tpu_custom_call.1} parent=1 // pred_check_branch
      %10 = sbr.rel (0) target = $region5
    $region4: #{tpu_custom_call.1} parent=1 // pred_region
      _
    $region5: #{tpu_custom_call.1} parent=1 // pred_fallthru
      _
    // Predicated region
    $region6: #{tpu_custom_call.1} parent=1 // pred_check
      _
    $region7: #{tpu_custom_call.1} parent=1 // pred_check_branch
      %12 = sbr.rel (0) target = $region9
    $region8: #{tpu_custom_call.1} parent=1 // pred_region
      %s14 = ssub.s32 512, 512
      %15 = vsyncadd [#allocation3], %s14
      %s16 = sshll.u32 [#allocation2], 4
      %s17 = int_to_ptr.vmem [resolvable:$true] %s16
      %22 = dma.hbm_to_vmem [thread:$0]  %s1, 512, %s17, [#allocation3], 128, 128, 8
    $region9: #{tpu_custom_call.1} parent=1 // pred_fallthru
      _
    // Predicated region
    $region10: #{tpu_custom_call.1} parent=1 // pred_check
      _
    $region11: #{tpu_custom_call.1} parent=1 // pred_check_branch
      %24 = sbr.rel (0) target = $region13
    $region12: #{tpu_custom_call.1} parent=1 // pred_region
      %25 = dma.done [#allocation3], 512
    $region13: #{tpu_custom_call.1} parent=1 // pred_fallthru
      _
    %v26 = vld [vmem:[%s0] sm:$0xff]
    %v27 = vld [vmem:[%s0 + $0x8] sm:$0xff]
    %v28 = vlaneseq
    %v29 = vand.u32 %v28, 127
    %30 = vset.pattern.permute.xlu0 0
    %31 = vperm.xlu0 %30, %v26
    %v32 = vpop.permute.xlu0 %31
    %33 = vset.pattern.permute.xlu0 0
    %34 = vperm.xlu0 %33, %v27
    %v35 = vpop.permute.xlu0 %34
    %vm36 = vcmp.eq.s32.totalorder %v29, %v32
    %vm37 = vcmp.eq.s32.totalorder %v29, %v35
    %v38 = vsel %vm36, 1, 0
    %v39 = vsel %vm37, 1, 0
    %v40 = vcvt.s32.f32 %v38
    %v41 = vcvt.s32.f32 %v39
    %v42 = vld [vmem:[#allocation2] sm:$0xff]
    %v43 = vld [vmem:[#allocation2 + $0x8] sm:$0xff]
    %v44 = vld [vmem:[#allocation2 + $0x10] sm:$0xff]
    %v45 = vld [vmem:[#allocation2 + $0x18] sm:$0xff]
    %vm46 = vcmask 261120
    %v48 = vsel %vm46, %v40, 0
    %v51 = vsel %vm46, %v41, 0
    %53 = vmatprep.subr.mxu0 0.0
    %54 = vmatpush1.msra.mxu0 0.0
    %55 = vmatprep.subr.mxu0 0.0
    %56 = vmatpush1.msra.mxu0 0.0
    %57 = vmatprep.subr.mxu0 0.0
    %58 = vmatpush1.msra.mxu0 0.0
    %59 = vmatprep.subr.mxu0 0.0
    %60 = vmatpush1.msra.mxu0 0.0
    %61 = vmatprep.subr.mxu0 0.0
    %62 = vmatpush1.msra.mxu0 0.0
    %63 = vmatprep.subr.mxu0 0.0
    %64 = vmatpush1.msra.mxu0 0.0
    %65 = vmatprep.subr.mxu0 0.0
    %66 = vmatpush1.msra.mxu0 0.0
    %67 = vmatprep.subr.mxu0 0.0
    %68 = vmatpush1.msra.mxu0 0.0
    %69 = vmatprep.subr.mxu0 0.0
    %70 = vmatpush1.msra.mxu0 0.0
    %71 = vmatprep.subr.mxu0 0.0
    %72 = vmatpush1.msra.mxu0 0.0
    %73 = vmatprep.subr.mxu0 0.0
    %74 = vmatpush1.msra.mxu0 0.0
    %75 = vmatprep.subr.mxu0 0.0
    %76 = vmatpush1.msra.mxu0 0.0
    %77 = vmatprep.subr.mxu0 0.0
    %78 = vmatpush1.msra.mxu0 %v45
    %79 = vmatprep.subr.mxu0 0.0
    %80 = vmatpush1.msra.mxu0 %v44
    %81 = vmatprep.subr.mxu0 0.0
    %82 = vmatpush1.msra.mxu0 %v43
    %83 = vmatprep.subr.mxu0 0.0
    %84 = vmatpush1.msra.mxu0 %v42
    %85 = vmatprep.subr.mxu0 0.0
    %86 = vmatpush2.msra.mxu0 0.0
    %87 = vmatprep.subr.mxu0 0.0
    %88 = vmatpush2.msra.mxu0 0.0
    %89 = vmatprep.subr.mxu0 0.0
    %90 = vmatpush2.msra.mxu0 0.0
    %91 = vmatprep.subr.mxu0 0.0
    %92 = vmatpush2.msra.mxu0 0.0
    %93 = vmatprep.subr.mxu0 0.0
    %94 = vmatpush2.msra.mxu0 0.0
    %95 = vmatprep.subr.mxu0 0.0
    %96 = vmatpush2.msra.mxu0 0.0
    %97 = vmatprep.subr.mxu0 0.0
    %98 = vmatpush2.msra.mxu0 0.0
    %99 = vmatprep.subr.mxu0 0.0
    %100 = vmatpush2.msra.mxu0 0.0
    %101 = vmatprep.subr.mxu0 0.0
    %102 = vmatpush2.msra.mxu0 0.0
    %103 = vmatprep.subr.mxu0 0.0
    %104 = vmatpush2.msra.mxu0 0.0
    %105 = vmatprep.subr.mxu0 0.0
    %106 = vmatpush2.msra.mxu0 0.0
    %107 = vmatprep.subr.mxu0 0.0
    %108 = vmatpush2.msra.mxu0 0.0
    %109 = vmatprep.subr.mxu0 0.0
    %110 = vmatpush2.msra.mxu0 0.0
    %111 = vmatprep.subr.mxu0 0.0
    %112 = vmatpush2.msra.mxu0 0.0
    %113 = vmatprep.subr.mxu0 0.0
    %114 = vmatpush2.msra.mxu0 0.0
    %115 = vmatprep.subr.mxu0 0.0
    %116 = vmatpush2.msra.mxu0 0.0
    %117 = vmatprep.mubr.f32.mxu0 0.0
    %118 = vmatmul.mubr.f32.gmra.mxu0 %v48
    %v119 = vpop.f32.mrf.mxu0
    %v120 = vadd.f32 0.0, %v119
    %v121 = vpop.f32.mrf.mxu0
    %122 = vmatprep.mubr.f32.mxu0 0.0
    %123 = vmatmul.mubr.f32.gmra.mxu0 %v51
    %v124 = vpop.f32.mrf.mxu0
    %v125 = vadd.f32 0.0, %v124
    %v126 = vpop.f32.mrf.mxu0
    %127 = vdwg.mxu0
    %128 = vst [vmem:[#allocation5] sm:$0xff] %v120
    %129 = vst [vmem:[#allocation5 + $0x8] sm:$0xff] %v125
    // Predicated region
    $region14: #{tpu_custom_call.1} parent=1 // pred_check
      _
    $region15: #{tpu_custom_call.1} parent=1 // pred_check_branch
      %131 = sbr.rel (0) target = $region17
    $region16: #{tpu_custom_call.1} parent=1 // pred_region
      %s133 = ssub.s32 256, 256
      %134 = vsyncadd [#allocation4], %s133
      %s135 = sshll.u32 [#allocation5], 4
      %s136 = int_to_ptr.vmem [resolvable:$true] %s135
      %141 = dma.vmem_to_hbm [thread:$0]  %s136, 256, %s2, [#allocation4], 128, 128, 8
    $region17: #{tpu_custom_call.1} parent=1 // pred_fallthru
      _
    // Predicated region
    $region18: #{tpu_custom_call.1} parent=1 // pred_check
      _
    $region19: #{tpu_custom_call.1} parent=1 // pred_check_branch
      %143 = sbr.rel (0) target = $region21
    $region20: #{tpu_custom_call.1} parent=1 // pred_region
      %144 = dma.done [#allocation4], 256
    $region21: #{tpu_custom_call.1} parent=1 // pred_fallthru
      _
    %145 = vsyncpa [#allocation3], 1
    %146 = vsyncpa [#allocation4], 1

</llo_original>
